<compile_context>
chip_gen: v6e
topology: v6e:2x2x1
jax: 0.10.0
libtpu: 0.0.40
codegen_flags: <defaults>
</compile_context>

<pallas_src>
import jax
import jax.numpy as jnp
from jax import lax
from jax.experimental import pallas as pl
from jax.experimental.pallas import tpu as pltpu

LN_EPS = 1e-5  # torch.nn.LayerNorm default eps


def _round_up(a, b):
    return (a + b - 1) // b * b


# ----------------------------------------------------------------------------
# Fused kernel
# ----------------------------------------------------------------------------
def _mlp_tail(h, p2_ref):
    """h -> Linear(W2,b2) -> ReLU -> LayerNorm(gamma,beta).  p2 = [W2;b2;gamma;beta]."""
    hid = p2_ref.shape[0] - 3
    w2 = p2_ref[0:hid, :]
    b2 = p2_ref[hid:hid + 1, :]
    gamma = p2_ref[hid + 1:hid + 2, :]
    beta = p2_ref[hid + 2:hid + 3, :]
    y = jnp.dot(h, w2, preferred_element_type=jnp.float32) + b2
    y = jnp.maximum(y, 0.0)
    mean = jnp.mean(y, axis=-1, keepdims=True)
    var = jnp.mean((y - mean) ** 2, axis=-1, keepdims=True)
    return (y - mean) * lax.rsqrt(var + LN_EPS) * gamma + beta


def _graphnet_kernel(
    # per-edge-tile blocks
    edge_attr_ref, eidx_ref,
    # VMEM-resident inputs (constant index_map)
    x_ref, u_ref, vidx_ref, cnts_ref,
    p1e_ref, p2e_ref, p1n_ref, p2n_ref, p1g_ref, p2g_ref,
    # outputs
    edge_out_ref, x_out_ref, u_out_ref,
    # VMEM scratch (persists across the edge-tile grid)
    xp_tgt, xp_src, up_e, node_agg, e_sum,
):
    k = pl.program_id(0)
    n_tiles = pl.num_programs(0)

    tile_e, e_in = edge_attr_ref.shape
    n_v, v_in = x_ref.shape
    n_u, u_in = u_ref.shape
    e_out = edge_out_ref.shape[1]

    # ---- one-time setup: zero accumulators; precompute the edge-MLP first-layer
    # projections of x / u ONCE (bf16, exact selection by the one-hot later). ----
    @pl.when(k == 0)
    def _init():
        xp_tgt[...] = jnp.dot(
            x_ref[...], p1e_ref[0:v_in, :],
            preferred_element_type=jnp.float32).astype(jnp.bfloat16)
        xp_src[...] = jnp.dot(
            x_ref[...], p1e_ref[v_in:2 * v_in, :],
            preferred_element_type=jnp.float32).astype(jnp.bfloat16)
        up_e[...] = jnp.dot(
            u_ref[...], p1e_ref[2 * v_in + e_in:2 * v_in + e_in + u_in, :],
            preferred_element_type=jnp.float32).astype(jnp.bfloat16)
        node_agg[...] = jnp.zeros_like(node_agg)
        e_sum[...] = jnp.zeros_like(e_sum)

    # ---- edge model for this edge tile ----
    tgt = eidx_ref[:, 0:1]
    src = eidx_ref[:, 1:2]
    eu = eidx_ref[:, 2:3]
    iota_v = lax.broadcasted_iota(jnp.int32, (tile_e, n_v), 1)
    iota_u = lax.broadcasted_iota(jnp.int32, (tile_e, n_u), 1)
    # padded edges carry index -1 -> all-zero one-hot rows -> no contribution.
    # bf16 one-hots are exact (0/1); bf16 error only comes from xp_* quantization.
    oh_tgt = (tgt == iota_v).astype(jnp.bfloat16)        # (tile_e, n_v)
    oh_src = (src == iota_v).astype(jnp.bfloat16)        # (tile_e, n_v)
    oh_eu = (eu == iota_u).astype(jnp.bfloat16)          # (tile_e, n_u)

    # K = e_in (tiny) contraction on the VPU instead of a wasted MXU pass.
    w1_e = p1e_ref[2 * v_in:2 * v_in + e_in, :]
    b1_e = p1e_ref[2 * v_in + e_in + u_in:2 * v_in + e_in + u_in + 1, :]
    ea = edge_attr_ref[...]
    if e_in <= 8:
        h_attr = ea[:, 0:1] * w1_e[0:1, :]
        for c in range(1, e_in):
            h_attr = h_attr + ea[:, c:c + 1] * w1_e[c:c + 1, :]
    else:
        h_attr = jnp.dot(ea, w1_e, preferred_element_type=jnp.float32)

    h = (jnp.dot(oh_tgt, xp_tgt[...], preferred_element_type=jnp.float32)
         + jnp.dot(oh_src, xp_src[...], preferred_element_type=jnp.float32)
         + jnp.dot(oh_eu, up_e[...], preferred_element_type=jnp.float32)
         + h_attr)
    h = jnp.maximum(h + b1_e, 0.0)
    e_new = _mlp_tail(h, p2e_ref)                         # (tile_e, e_out), f32
    edge_out_ref[...] = e_new

    # ---- scatter_add(e_new, tgt) and per-graph edge sum, accumulated in f32.
    # One-hots are rebuilt fresh here (cheap VPU compares) so the bf16 gather
    # one-hots above are not live across _mlp_tail. ----
    oh_tgt_f = (tgt == iota_v).astype(jnp.float32)
    oh_eu_f = (eu == iota_u).astype(jnp.float32)
    dn = (((0,), (0,)), ((), ()))   # contract over the edge (row) axis
    node_agg[...] += lax.dot_general(oh_tgt_f, e_new, dn,
                                     preferred_element_type=jnp.float32)
    e_sum[...] += lax.dot_general(oh_eu_f, e_new, dn,
                                  preferred_element_type=jnp.float32)

    # ---- last edge tile: node model + global model, all from VMEM ----
    @pl.when(k == n_tiles - 1)
    def _finish():
        oh_vu = (vidx_ref[...] ==
                 lax.broadcasted_iota(jnp.int32, (n_v, n_u), 1)).astype(jnp.float32)

        # node model: node_mlp(cat([x, agg, u[v_idx]], 1))
        w1n_x = p1n_ref[0:v_in, :]
        w1n_a = p1n_ref[v_in:v_in + e_out, :]
        w1n_u = p1n_ref[v_in + e_out:v_in + e_out + u_in, :]
        b1n = p1n_ref[v_in + e_out + u_in:v_in + e_out + u_in + 1, :]
        u_gather = jnp.dot(oh_vu, u_ref[...], preferred_element_type=jnp.float32)
        hn = (jnp.dot(x_ref[...], w1n_x, preferred_element_type=jnp.float32)
              + jnp.dot(node_agg[...], w1n_a, preferred_element_type=jnp.float32)
              + jnp.dot(u_gather, w1n_u, preferred_element_type=jnp.float32))
        hn = jnp.maximum(hn + b1n, 0.0)
        x_new = _mlp_tail(hn, p2n_ref)                    # (n_v, v_out)
        x_out_ref[...] = x_new
        v_out = x_new.shape[1]

        # global model: global_mlp(cat([u, mean_v(x'), mean_e(edge')], 1))
        # counts were precomputed in the wrapper: cnts[:,0]=edge count, [:,1]=node count
        e_cnt = cnts_ref[:, 0:1]
        v_cnt = cnts_ref[:, 1:2]
        v_sum = lax.dot_general(oh_vu, x_new, dn, preferred_element_type=jnp.float32)
        mean_x = v_sum / jnp.maximum(v_cnt, 1.0)
        mean_e = e_sum[...] / jnp.maximum(e_cnt, 1.0)

        w1g_u = p1g_ref[0:u_in, :]
        w1g_x = p1g_ref[u_in:u_in + v_out, :]
        w1g_e = p1g_ref[u_in + v_out:u_in + v_out + e_out, :]
        b1g = p1g_ref[u_in + v_out + e_out:u_in + v_out + e_out + 1, :]
        hg = (jnp.dot(u_ref[...], w1g_u, preferred_element_type=jnp.float32)
              + jnp.dot(mean_x, w1g_x, preferred_element_type=jnp.float32)
              + jnp.dot(mean_e, w1g_e, preferred_element_type=jnp.float32))
        hg = jnp.maximum(hg + b1g, 0.0)
        u_out_ref[...] = _mlp_tail(hg, p2g_ref)


# ----------------------------------------------------------------------------
# Wrapper: one pallas_call for the whole forward pass
# ----------------------------------------------------------------------------
def graphnet_forward(params, x, edge_index, edge_attr, u, v_indices, e_indices,
                     *, tile_e=512):
    x = x.astype(jnp.float32)
    edge_attr = edge_attr.astype(jnp.float32)
    u = u.astype(jnp.float32)

    n_v, v_in = x.shape
    n_e, e_in = edge_attr.shape
    n_u, u_in = u.shape

    p1e, p2e = params["edge"]
    p1n, p2n = params["node"]
    p1g, p2g = params["global"]
    hidden = p1e.shape[1]
    e_out = p2e.shape[1]
    v_out = p2n.shape[1]
    u_out = p2g.shape[1]

    tgt = edge_index[0].astype(jnp.int32)
    src = edge_index[1].astype(jnp.int32)
    eidx = e_indices.astype(jnp.int32)
    vidx = v_indices.astype(jnp.int32).reshape(n_v, 1)

    # Per-graph segment counts for the scatter_means (tiny; computed once here
    # so the kernel never issues an N=1 count matmul per tile).
    e_cnt = jnp.zeros((n_u,), jnp.float32).at[eidx].add(1.0)
    v_cnt = jnp.zeros((n_u,), jnp.float32).at[v_indices.astype(jnp.int32)].add(1.0)
    cnts = jnp.stack([e_cnt, v_cnt], axis=1)              # (n_u, 2)

    # Pack the three per-edge index columns into one int32 block input.
    idx = jnp.stack([tgt, src, eidx], axis=1)             # (n_e, 3)

    # Pad the edge dimension to a whole number of tiles; padded rows get index -1
    # (all-zero one-hot rows -> no scatter contribution) and their MLP outputs
    # are sliced off below.
    tile_e = int(min(tile_e, _round_up(n_e, 8)))
    if n_v >= 2048:
        tile_e = min(tile_e, 256)   # keep (tile_e, n_v) temporaries inside v7x VMEM
    n_e_pad = _round_up(n_e, tile_e)
    pad = n_e_pad - n_e
    if pad:
        edge_attr = jnp.pad(edge_attr, ((0, pad), (0, 0)))
        idx = jnp.pad(idx, ((0, pad), (0, 0)), constant_values=-1)
    n_tiles = n_e_pad // tile_e

    def edge_blk(cols):
        return pl.BlockSpec((tile_e, cols), lambda k: (k, 0))

    def resident(arr):
        return pl.BlockSpec(arr.shape, lambda k: (0, 0))

    grid_spec = pltpu.PrefetchScalarGridSpec(
        num_scalar_prefetch=0,
        grid=(n_tiles,),
        in_specs=[
            edge_blk(e_in), edge_blk(3),
            resident(x), resident(u), resident(vidx), resident(cnts),
            resident(p1e), resident(p2e),
            resident(p1n), resident(p2n),
            resident(p1g), resident(p2g),
        ],
        out_specs=(
            pl.BlockSpec((tile_e, e_out), lambda k: (k, 0)),
            pl.BlockSpec((n_v, v_out), lambda k: (0, 0)),
            pl.BlockSpec((n_u, u_out), lambda k: (0, 0)),
        ),
        scratch_shapes=[
            pltpu.VMEM((n_v, hidden), jnp.bfloat16),  # x @ W1e_tgt (bf16 gather src)
            pltpu.VMEM((n_v, hidden), jnp.bfloat16),  # x @ W1e_src
            pltpu.VMEM((n_u, hidden), jnp.bfloat16),  # u @ W1e_u
            pltpu.VMEM((n_v, e_out), jnp.float32),    # scatter_add(edge', tgt)  (f32)
            pltpu.VMEM((n_u, e_out), jnp.float32),    # per-graph sum(edge')     (f32)
        ],
    )

    out_shape = (
        jax.ShapeDtypeStruct((n_e_pad, e_out), jnp.float32),
        jax.ShapeDtypeStruct((n_v, v_out), jnp.float32),
        jax.ShapeDtypeStruct((n_u, u_out), jnp.float32),
    )

    edge_new, x_new, u_new = pl.pallas_call(
        _graphnet_kernel,
        out_shape=out_shape,
        grid_spec=grid_spec,
        compiler_params=pltpu.CompilerParams(
            # edge-tile axis carries the scatter accumulators -> reduction axis.
            dimension_semantics=("arbitrary",),
            # 40 MiB leaves double-buffer / spill headroom on v7x's 64 MiB VMEM
            # while still allowing large tiles on v5e/v6e (128 MiB).
            vmem_limit_bytes=40 * 1024 * 1024,
        ),
    )(edge_attr, idx, x, u, vidx, cnts, p1e, p2e, p1n, p2n, p1g, p2g)

    return x_new, edge_new[:n_e], u_new


# ----------------------------------------------------------------------------
# Parameter setup (deterministic, synthetic — no checkpoint loading)
# ----------------------------------------------------------------------------
def init_mlp_params(key, in_size, out_size, hidden_size):
    k1, k2, k3, k4 = jax.random.split(key, 4)
    w1 = jax.random.normal(k1, (in_size, hidden_size), jnp.float32) / jnp.sqrt(
        jnp.float32(in_size))
    b1 = 0.01 * jax.random.normal(k2, (1, hidden_size), jnp.float32)
    w2 = jax.random.normal(k3, (hidden_size, out_size), jnp.float32) / jnp.sqrt(
        jnp.float32(hidden_size))
    b2 = 0.01 * jax.random.normal(k4, (1, out_size), jnp.float32)
    gamma = jnp.ones((1, out_size), jnp.float32)   # LayerNorm default init
    beta = jnp.zeros((1, out_size), jnp.float32)
    # Packed: p1 = [W1; b1] (in_size+1, H),  p2 = [W2; b2; gamma; beta] (H+3, out)
    return (jnp.concatenate([w1, b1], axis=0),
            jnp.concatenate([w2, b2, gamma, beta], axis=0))


def init_graphnet(key, in_dims, out_dims, hidden_size=64):
    v_in, e_in, u_in = in_dims
    v_out, e_out, u_out = out_dims
    ke, kn, kg = jax.random.split(key, 3)
    # W1 row order matches the torch.cat order of the reference model.
    return {
        "edge": init_mlp_params(ke, 2 * v_in + e_in + u_in, e_out, hidden_size),
        "node": init_mlp_params(kn, v_in + e_out + u_in, v_out, hidden_size),
        "global": init_mlp_params(kg, u_in + v_out + e_out, u_out, hidden_size),
    }


# ----------------------------------------------------------------------------
# Plain-JAX reference (for numerical sanity checking only)
# ----------------------------------------------------------------------------
def _mlp_ref(p1, p2, inp):
    in_size = p1.shape[0] - 1
    hid = p2.shape[0] - 3
    w1, b1 = p1[:in_size], p1[in_size:]
    w2, b2 = p2[:hid], p2[hid:hid + 1]
    gamma, beta = p2[hid + 1:hid + 2], p2[hid + 2:hid + 3]
    h = jnp.maximum(inp @ w1 + b1, 0.0)
    y = jnp.maximum(h @ w2 + b2, 0.0)
    mean = y.mean(-1, keepdims=True)
    var = ((y - mean) ** 2).mean(-1, keepdims=True)
    return (y - mean) * lax.rsqrt(var + LN_EPS) * gamma + beta


def graphnet_reference(params, x, edge_index, edge_attr, u, v_indices, e_indices):
    tgt, src = edge_index[0], edge_index[1]
    n_v, n_u = x.shape[0], u.shape[0]

    def seg_mean(vals, idx, n):
        s = jnp.zeros((n, vals.shape[1]), jnp.float32).at[idx].add(vals)
        c = jnp.zeros((n, 1), jnp.float32).at[idx].add(
            jnp.ones((vals.shape[0], 1), jnp.float32))
        return s / jnp.maximum(c, 1.0)

    e_new = _mlp_ref(*params["edge"],
                     jnp.concatenate([x[tgt], x[src], edge_attr, u[e_indices]], 1))
    agg = jnp.zeros((n_v, e_new.shape[1]), jnp.float32).at[tgt].add(e_new)
    x_new = _mlp_ref(*params["node"],
                     jnp.concatenate([x, agg, u[v_indices]], 1))
    u_new = _mlp_ref(*params["global"],
                     jnp.concatenate([u, seg_mean(x_new, v_indices, n_u),
                                      seg_mean(e_new, e_indices, n_u)], 1))
    return x_new, e_new, u_new


# ----------------------------------------------------------------------------
# Example run
# ----------------------------------------------------------------------------
if __name__ == "__main__":
    key = jax.random.PRNGKey(0)

    in_dims = (4, 2, 3)      # (v_in, e_in, u_in)
    out_dims = (8, 8, 8)     # (v_out, e_out, u_out)
    hidden_size = 64         # GraphNet default
    n_v, n_e, n_u = 8, 16, 2

    kx, ke, ku, kt, ks, kp = jax.random.split(key, 6)
    x = jax.random.normal(kx, (n_v, in_dims[0]), jnp.float32)
    edge_attr = jax.random.normal(ke, (n_e, in_dims[1]), jnp.float32)
    u = jax.random.normal(ku, (n_u, in_dims[2]), jnp.float32)
    tgt = jax.random.randint(kt, (n_e,), 0, n_v, jnp.int32)
    src = jax.random.randint(ks, (n_e,), 0, n_v, jnp.int32)
    edge_index = jnp.stack([tgt, src], axis=0)                 # (2, n_e)
    v_indices = jnp.concatenate([jnp.zeros((n_v // 2,), jnp.int32),
                                 jnp.ones((n_v - n_v // 2,), jnp.int32)])
    e_indices = jnp.concatenate([jnp.zeros((n_e // 2,), jnp.int32),
                                 jnp.ones((n_e - n_e // 2,), jnp.int32)])

    params = init_graphnet(kp, in_dims, out_dims, hidden_size)

    fwd = jax.jit(graphnet_forward)
    x_new, edge_new, u_new = fwd(params, x, edge_index, edge_attr, u,
                                 v_indices, e_indices)
    jax.block_until_ready((x_new, edge_new, u_new))

    assert x_new.shape == (n_v, out_dims[0])
    assert edge_new.shape == (n_e, out_dims[1])
    assert u_new.shape == (n_u, out_dims[2])

    # Numerical sanity check against a plain-JAX f32 implementation of the same
    # math.  Tolerance reflects the bf16 gather path (x@W1 / u@W1 quantized to
    # bf16 before the exact one-hot selection); scatters/LayerNorm stay f32.
    x_r, e_r, u_r = graphnet_reference(params, x, edge_index, edge_attr, u,
                                       v_indices, e_indices)
    err = max(float(jnp.max(jnp.abs(x_new - x_r))),
              float(jnp.max(jnp.abs(edge_new - e_r))),
              float(jnp.max(jnp.abs(u_new - u_r))))
    assert err < 3e-2, f"mismatch vs reference: {err}"

    print("KERNEL_OK")
</pallas_src>

<mosaic_0001>
module attributes {stable_mosaic.version = 11 : i64} {
  func.func private @main(%arg0: i32) attributes {dimension_semantics = [#tpu.dimension_semantics<core_parallel>], iteration_bounds = array<i64: 2>, tpu.core_type = #tpu.core_type<sc_scalar_subcore>, window_params = []} {
    return
  }
}

module attributes {stable_mosaic.version = 11 : i64} {
  func.func private @main(%arg0: i32) attributes {dimension_semantics = [#tpu.dimension_semantics<core_parallel>], iteration_bounds = array<i64: 2>, tpu.core_type = #tpu.core_type<sc_scalar_subcore>, window_params = []} {
    return
  }
}

module attributes {stable_mosaic.version = 11 : i64} {
  func.func @_graphnet_kernel(%arg0: i32, %arg1: memref<16x2xf32, #tpu.memory_space<vmem>>, %arg2: memref<16x3xi32, #tpu.memory_space<vmem>>, %arg3: memref<8x4xf32, #tpu.memory_space<vmem>>, %arg4: memref<2x3xf32, #tpu.memory_space<vmem>>, %arg5: memref<8x1xi32, #tpu.memory_space<vmem>>, %arg6: memref<2x2xf32, #tpu.memory_space<vmem>>, %arg7: memref<14x64xf32, #tpu.memory_space<vmem>>, %arg8: memref<67x8xf32, #tpu.memory_space<vmem>>, %arg9: memref<16x64xf32, #tpu.memory_space<vmem>>, %arg10: memref<67x8xf32, #tpu.memory_space<vmem>>, %arg11: memref<20x64xf32, #tpu.memory_space<vmem>>, %arg12: memref<67x8xf32, #tpu.memory_space<vmem>>, %arg13: memref<16x8xf32, #tpu.memory_space<vmem>>, %arg14: memref<8x8xf32, #tpu.memory_space<vmem>>, %arg15: memref<2x8xf32, #tpu.memory_space<vmem>>, %arg16: memref<8x64xbf16, #tpu.memory_space<vmem>>, %arg17: memref<8x64xbf16, #tpu.memory_space<vmem>>, %arg18: memref<2x64xbf16, #tpu.memory_space<vmem>>, %arg19: memref<8x8xf32, #tpu.memory_space<vmem>>, %arg20: memref<2x8xf32, #tpu.memory_space<vmem>>) attributes {dimension_semantics = [#tpu.dimension_semantics<arbitrary>], iteration_bounds = array<i64: 1>, scalar_prefetch = 0 : i64, scratch_operands = 5 : i64, tpu.core_type = #tpu.core_type<tc>, window_params = [{transform_indices = @transform_0, window_bounds = array<i64: 16, 2>}, {transform_indices = @transform_1, window_bounds = array<i64: 16, 3>}, {pipeline_mode = #tpu.pipeline_mode<synchronous>, transform_indices = @transform_2, window_bounds = array<i64: 8, 4>}, {pipeline_mode = #tpu.pipeline_mode<synchronous>, transform_indices = @transform_3, window_bounds = array<i64: 2, 3>}, {pipeline_mode = #tpu.pipeline_mode<synchronous>, transform_indices = @transform_4, window_bounds = array<i64: 8, 1>}, {pipeline_mode = #tpu.pipeline_mode<synchronous>, transform_indices = @transform_5, window_bounds = array<i64: 2, 2>}, {pipeline_mode = #tpu.pipeline_mode<synchronous>, transform_indices = @transform_6, window_bounds = array<i64: 14, 64>}, {pipeline_mode = #tpu.pipeline_mode<synchronous>, transform_indices = @transform_7, window_bounds = array<i64: 67, 8>}, {pipeline_mode = #tpu.pipeline_mode<synchronous>, transform_indices = @transform_8, window_bounds = array<i64: 16, 64>}, {pipeline_mode = #tpu.pipeline_mode<synchronous>, transform_indices = @transform_9, window_bounds = array<i64: 67, 8>}, {pipeline_mode = #tpu.pipeline_mode<synchronous>, transform_indices = @transform_10, window_bounds = array<i64: 20, 64>}, {pipeline_mode = #tpu.pipeline_mode<synchronous>, transform_indices = @transform_11, window_bounds = array<i64: 67, 8>}, {transform_indices = @transform_12, window_bounds = array<i64: 16, 8>}, {pipeline_mode = #tpu.pipeline_mode<synchronous>, transform_indices = @transform_13, window_bounds = array<i64: 8, 8>}, {pipeline_mode = #tpu.pipeline_mode<synchronous>, transform_indices = @transform_14, window_bounds = array<i64: 2, 8>}]} {
    %c0_i32 = arith.constant 0 : i32
    %0 = arith.cmpi eq, %arg0, %c0_i32 : i32
    %1 = arith.extui %0 : i1 to i32
    %c0_i32_0 = arith.constant 0 : i32
    %2 = arith.cmpi ne, %1, %c0_i32_0 : i32
    scf.if %2 {
      %c0_43 = arith.constant 0 : index
      %c0_44 = arith.constant 0 : index
      %101 = vector.load %arg3[%c0_43, %c0_44] : memref<8x4xf32, #tpu.memory_space<vmem>>, vector<8x4xf32>
      %c0_45 = arith.constant 0 : index
      %c0_46 = arith.constant 0 : index
      %102 = vector.load %arg7[%c0_45, %c0_46] : memref<14x64xf32, #tpu.memory_space<vmem>>, vector<4x64xf32>
      %cst_47 = arith.constant dense<0.000000e+00> : vector<8x64xf32>
      %103 = tpu.matmul %101, %102, %cst_47 {dimension_numbers = #tpu.dot_dimension_numbers<[1], [0], [0], [1], [0, 0, 1, 1], [], []>} : vector<8x4xf32>, vector<4x64xf32>, vector<8x64xf32> -> vector<8x64xf32>
      %104 = arith.truncf %103 : vector<8x64xf32> to vector<8x64xbf16>
      %c0_48 = arith.constant 0 : index
      %c0_49 = arith.constant 0 : index
      %105 = vector.load %arg16[%c0_48, %c0_49] : memref<8x64xbf16, #tpu.memory_space<vmem>>, vector<8x64xbf16>
      tpu.vector_store %arg16[%c0_48, %c0_49], %104 {strides = array<i32>} : memref<8x64xbf16, #tpu.memory_space<vmem>>, vector<8x64xbf16>,
      %c0_50 = arith.constant 0 : index
      %c0_51 = arith.constant 0 : index
      %106 = vector.load %arg3[%c0_50, %c0_51] : memref<8x4xf32, #tpu.memory_space<vmem>>, vector<8x4xf32>
      %c4 = arith.constant 4 : index
      %c0_52 = arith.constant 0 : index
      %107 = vector.load %arg7[%c4, %c0_52] : memref<14x64xf32, #tpu.memory_space<vmem>>, vector<4x64xf32>
      %cst_53 = arith.constant dense<0.000000e+00> : vector<8x64xf32>
      %108 = tpu.matmul %106, %107, %cst_53 {dimension_numbers = #tpu.dot_dimension_numbers<[1], [0], [0], [1], [0, 0, 1, 1], [], []>} : vector<8x4xf32>, vector<4x64xf32>, vector<8x64xf32> -> vector<8x64xf32>
      %109 = arith.truncf %108 : vector<8x64xf32> to vector<8x64xbf16>
      %c0_54 = arith.constant 0 : index
      %c0_55 = arith.constant 0 : index
      %110 = vector.load %arg17[%c0_54, %c0_55] : memref<8x64xbf16, #tpu.memory_space<vmem>>, vector<8x64xbf16>
      tpu.vector_store %arg17[%c0_54, %c0_55], %109 {strides = array<i32>} : memref<8x64xbf16, #tpu.memory_space<vmem>>, vector<8x64xbf16>,
      %c0_56 = arith.constant 0 : index
      %c0_57 = arith.constant 0 : index
      %111 = vector.load %arg4[%c0_56, %c0_57] : memref<2x3xf32, #tpu.memory_space<vmem>>, vector<2x3xf32>
      %c10 = arith.constant 10 : index
      %c0_58 = arith.constant 0 : index
      %112 = vector.load %arg7[%c10, %c0_58] : memref<14x64xf32, #tpu.memory_space<vmem>>, vector<3x64xf32>
      %cst_59 = arith.constant dense<0.000000e+00> : vector<2x64xf32>
      %113 = tpu.matmul %111, %112, %cst_59 {dimension_numbers = #tpu.dot_dimension_numbers<[1], [0], [0], [1], [0, 0, 1, 1], [], []>} : vector<2x3xf32>, vector<3x64xf32>, vector<2x64xf32> -> vector<2x64xf32>
      %114 = arith.truncf %113 : vector<2x64xf32> to vector<2x64xbf16>
      %c0_60 = arith.constant 0 : index
      %c0_61 = arith.constant 0 : index
      %115 = vector.load %arg18[%c0_60, %c0_61] : memref<2x64xbf16, #tpu.memory_space<vmem>>, vector<2x64xbf16>
      tpu.vector_store %arg18[%c0_60, %c0_61], %114 {strides = array<i32>} : memref<2x64xbf16, #tpu.memory_space<vmem>>, vector<2x64xbf16>,
      %cst_62 = arith.constant 0.000000e+00 : f32
      %116 = vector.broadcast %cst_62 : f32 to vector<8x8xf32>
      %c0_63 = arith.constant 0 : index
      %c0_64 = arith.constant 0 : index
      %117 = vector.load %arg19[%c0_63, %c0_64] : memref<8x8xf32, #tpu.memory_space<vmem>>, vector<8x8xf32>
      tpu.vector_store %arg19[%c0_63, %c0_64], %116 {strides = array<i32>} : memref<8x8xf32, #tpu.memory_space<vmem>>, vector<8x8xf32>,
      %cst_65 = arith.constant 0.000000e+00 : f32
      %118 = vector.broadcast %cst_65 : f32 to vector<2x8xf32>
      %c0_66 = arith.constant 0 : index
      %c0_67 = arith.constant 0 : index
      %119 = vector.load %arg20[%c0_66, %c0_67] : memref<2x8xf32, #tpu.memory_space<vmem>>, vector<2x8xf32>
      tpu.vector_store %arg20[%c0_66, %c0_67], %118 {strides = array<i32>} : memref<2x8xf32, #tpu.memory_space<vmem>>, vector<2x8xf32>,
    } else {
    }
    %c0 = arith.constant 0 : index
    %c0_1 = arith.constant 0 : index
    %3 = vector.load %arg2[%c0, %c0_1] : memref<16x3xi32, #tpu.memory_space<vmem>>, vector<16x1xi32>
    %c0_2 = arith.constant 0 : index
    %c1 = arith.constant 1 : index
    %4 = vector.load %arg2[%c0_2, %c1] : memref<16x3xi32, #tpu.memory_space<vmem>>, vector<16x1xi32>
    %c0_3 = arith.constant 0 : index
    %c2 = arith.constant 2 : index
    %5 = vector.load %arg2[%c0_3, %c2] : memref<16x3xi32, #tpu.memory_space<vmem>>, vector<16x1xi32>
    %6 = tpu.iota {dimensions = array<i32: 1>} : vector<16x8xi32>
    %7 = tpu.iota {dimensions = array<i32: 1>} : vector<16x2xi32>
    %8 = vector.broadcast %3 : vector<16x1xi32> to vector<16x8xi32>
    %9 = arith.cmpi eq, %8, %6 : vector<16x8xi32>
    %10 = arith.extui %9 : vector<16x8xi1> to vector<16x8xi32>
    %11 = arith.sitofp %10 : vector<16x8xi32> to vector<16x8xf32>
    %12 = arith.truncf %11 : vector<16x8xf32> to vector<16x8xbf16>
    %13 = vector.broadcast %4 : vector<16x1xi32> to vector<16x8xi32>
    %14 = arith.cmpi eq, %13, %6 : vector<16x8xi32>
    %15 = arith.extui %14 : vector<16x8xi1> to vector<16x8xi32>
    %16 = arith.sitofp %15 : vector<16x8xi32> to vector<16x8xf32>
    %17 = arith.truncf %16 : vector<16x8xf32> to vector<16x8xbf16>
    %18 = vector.broadcast %5 : vector<16x1xi32> to vector<16x2xi32>
    %19 = arith.cmpi eq, %18, %7 : vector<16x2xi32>
    %20 = arith.extui %19 : vector<16x2xi1> to vector<16x2xi32>
    %21 = arith.sitofp %20 : vector<16x2xi32> to vector<16x2xf32>
    %22 = arith.truncf %21 : vector<16x2xf32> to vector<16x2xbf16>
    %c8 = arith.constant 8 : index
    %c0_4 = arith.constant 0 : index
    %23 = vector.load %arg7[%c8, %c0_4] : memref<14x64xf32, #tpu.memory_space<vmem>>, vector<2x64xf32>
    %c13 = arith.constant 13 : index
    %c0_5 = arith.constant 0 : index
    %24 = vector.load %arg7[%c13, %c0_5] : memref<14x64xf32, #tpu.memory_space<vmem>>, vector<1x64xf32>
    %c0_6 = arith.constant 0 : index
    %c0_7 = arith.constant 0 : index
    %25 = vector.load %arg1[%c0_6, %c0_7] : memref<16x2xf32, #tpu.memory_space<vmem>>, vector<16x2xf32>
    %26 = vector.extract_strided_slice %25 {offsets = [0, 0], sizes = [16, 1], strides = [1, 1]} : vector<16x2xf32> to vector<16x1xf32>
    %27 = vector.extract_strided_slice %23 {offsets = [0, 0], sizes = [1, 64], strides = [1, 1]} : vector<2x64xf32> to vector<1x64xf32>
    %28 = vector.broadcast %26 : vector<16x1xf32> to vector<16x64xf32>
    %29 = vector.broadcast %27 : vector<1x64xf32> to vector<16x64xf32>
    %30 = arith.mulf %28, %29 : vector<16x64xf32>
    %31 = vector.extract_strided_slice %25 {offsets = [0, 1], sizes = [16, 1], strides = [1, 1]} : vector<16x2xf32> to vector<16x1xf32>
    %32 = vector.extract_strided_slice %23 {offsets = [1, 0], sizes = [1, 64], strides = [1, 1]} : vector<2x64xf32> to vector<1x64xf32>
    %33 = vector.broadcast %31 : vector<16x1xf32> to vector<16x64xf32>
    %34 = vector.broadcast %32 : vector<1x64xf32> to vector<16x64xf32>
    %35 = arith.mulf %33, %34 : vector<16x64xf32>
    %36 = arith.addf %30, %35 : vector<16x64xf32>
    %c0_8 = arith.constant 0 : index
    %c0_9 = arith.constant 0 : index
    %37 = vector.load %arg16[%c0_8, %c0_9] : memref<8x64xbf16, #tpu.memory_space<vmem>>, vector<8x64xbf16>
    %cst = arith.constant dense<0.000000e+00> : vector<16x64xf32>
    %38 = tpu.matmul %12, %37, %cst {dimension_numbers = #tpu.dot_dimension_numbers<[1], [0], [0], [1], [0, 0, 1, 1], [], []>} : vector<16x8xbf16>, vector<8x64xbf16>, vector<16x64xf32> -> vector<16x64xf32>
    %c0_10 = arith.constant 0 : index
    %c0_11 = arith.constant 0 : index
    %39 = vector.load %arg17[%c0_10, %c0_11] : memref<8x64xbf16, #tpu.memory_space<vmem>>, vector<8x64xbf16>
    %cst_12 = arith.constant dense<0.000000e+00> : vector<16x64xf32>
    %40 = tpu.matmul %17, %39, %cst_12 {dimension_numbers = #tpu.dot_dimension_numbers<[1], [0], [0], [1], [0, 0, 1, 1], [], []>} : vector<16x8xbf16>, vector<8x64xbf16>, vector<16x64xf32> -> vector<16x64xf32>
    %41 = arith.addf %38, %40 : vector<16x64xf32>
    %c0_13 = arith.constant 0 : index
    %c0_14 = arith.constant 0 : index
    %42 = vector.load %arg18[%c0_13, %c0_14] : memref<2x64xbf16, #tpu.memory_space<vmem>>, vector<2x64xbf16>
    %cst_15 = arith.constant dense<0.000000e+00> : vector<16x64xf32>
    %43 = tpu.matmul %22, %42, %cst_15 {dimension_numbers = #tpu.dot_dimension_numbers<[1], [0], [0], [1], [0, 0, 1, 1], [], []>} : vector<16x2xbf16>, vector<2x64xbf16>, vector<16x64xf32> -> vector<16x64xf32>
    %44 = arith.addf %41, %43 : vector<16x64xf32>
    %45 = arith.addf %44, %36 : vector<16x64xf32>
    %46 = vector.broadcast %24 : vector<1x64xf32> to vector<16x64xf32>
    %47 = arith.addf %45, %46 : vector<16x64xf32>
    %cst_16 = arith.constant 0.000000e+00 : f32
    %48 = vector.broadcast %cst_16 : f32 to vector<16x64xf32>
    %49 = arith.maximumf %47, %48 : vector<16x64xf32>
    %c0_17 = arith.constant 0 : index
    %c0_18 = arith.constant 0 : index
    %50 = vector.load %arg8[%c0_17, %c0_18] : memref<67x8xf32, #tpu.memory_space<vmem>>, vector<64x8xf32>
    %c64 = arith.constant 64 : index
    %c0_19 = arith.constant 0 : index
    %51 = vector.load %arg8[%c64, %c0_19] : memref<67x8xf32, #tpu.memory_space<vmem>>, vector<1x8xf32>
    %c65 = arith.constant 65 : index
    %c0_20 = arith.constant 0 : index
    %52 = vector.load %arg8[%c65, %c0_20] : memref<67x8xf32, #tpu.memory_space<vmem>>, vector<1x8xf32>
    %c66 = arith.constant 66 : index
    %c0_21 = arith.constant 0 : index
    %53 = vector.load %arg8[%c66, %c0_21] : memref<67x8xf32, #tpu.memory_space<vmem>>, vector<1x8xf32>
    %cst_22 = arith.constant dense<0.000000e+00> : vector<16x8xf32>
    %54 = tpu.matmul %49, %50, %cst_22 {dimension_numbers = #tpu.dot_dimension_numbers<[1], [0], [0], [1], [0, 0, 1, 1], [], []>} : vector<16x64xf32>, vector<64x8xf32>, vector<16x8xf32> -> vector<16x8xf32>
    %55 = vector.broadcast %51 : vector<1x8xf32> to vector<16x8xf32>
    %56 = arith.addf %54, %55 : vector<16x8xf32>
    %cst_23 = arith.constant 0.000000e+00 : f32
    %57 = vector.broadcast %cst_23 : f32 to vector<16x8xf32>
    %58 = arith.maximumf %56, %57 : vector<16x8xf32>
    %cst_24 = arith.constant dense<0.000000e+00> : vector<16xf32>
    %59 = vector.multi_reduction <add>, %58, %cst_24 [1] : vector<16x8xf32> to vector<16xf32>
    %60 = vector.shape_cast %59 : vector<16xf32> to vector<16x1xf32>
    %cst_25 = arith.constant 8.000000e+00 : f32
    %61 = vector.broadcast %cst_25 : f32 to vector<16x1xf32>
    %62 = arith.divf %60, %61 : vector<16x1xf32>
    %63 = vector.broadcast %62 : vector<16x1xf32> to vector<16x8xf32>
    %64 = arith.subf %58, %63 : vector<16x8xf32>
    %65 = arith.mulf %64, %64 : vector<16x8xf32>
    %cst_26 = arith.constant dense<0.000000e+00> : vector<16xf32>
    %66 = vector.multi_reduction <add>, %65, %cst_26 [1] : vector<16x8xf32> to vector<16xf32>
    %67 = vector.shape_cast %66 : vector<16xf32> to vector<16x1xf32>
    %cst_27 = arith.constant 8.000000e+00 : f32
    %68 = vector.broadcast %cst_27 : f32 to vector<16x1xf32>
    %69 = arith.divf %67, %68 : vector<16x1xf32>
    %70 = vector.broadcast %62 : vector<16x1xf32> to vector<16x8xf32>
    %71 = arith.subf %58, %70 : vector<16x8xf32>
    %cst_28 = arith.constant 9.99999974E-6 : f32
    %72 = vector.broadcast %cst_28 : f32 to vector<16x1xf32>
    %73 = arith.addf %69, %72 : vector<16x1xf32>
    %74 = math.rsqrt %73 : vector<16x1xf32>
    %75 = vector.broadcast %74 : vector<16x1xf32> to vector<16x8xf32>
    %76 = arith.mulf %71, %75 : vector<16x8xf32>
    %77 = vector.broadcast %52 : vector<1x8xf32> to vector<16x8xf32>
    %78 = arith.mulf %76, %77 : vector<16x8xf32>
    %79 = vector.broadcast %53 : vector<1x8xf32> to vector<16x8xf32>
    %80 = arith.addf %78, %79 : vector<16x8xf32>
    %c0_29 = arith.constant 0 : index
    %c0_30 = arith.constant 0 : index
    %81 = vector.load %arg13[%c0_29, %c0_30] : memref<16x8xf32, #tpu.memory_space<vmem>>, vector<16x8xf32>
    tpu.vector_store %arg13[%c0_29, %c0_30], %80 {strides = array<i32>} : memref<16x8xf32, #tpu.memory_space<vmem>>, vector<16x8xf32>,
    %82 = vector.broadcast %3 : vector<16x1xi32> to vector<16x8xi32>
    %83 = arith.cmpi eq, %82, %6 : vector<16x8xi32>
    %84 = arith.extui %83 : vector<16x8xi1> to vector<16x8xi32>
    %85 = arith.sitofp %84 : vector<16x8xi32> to vector<16x8xf32>
    %86 = vector.broadcast %5 : vector<16x1xi32> to vector<16x2xi32>
    %87 = arith.cmpi eq, %86, %7 : vector<16x2xi32>
    %88 = arith.extui %87 : vector<16x2xi1> to vector<16x2xi32>
    %89 = arith.sitofp %88 : vector<16x2xi32> to vector<16x2xf32>
    %c0_31 = arith.constant 0 : index
    %c0_32 = arith.constant 0 : index
    %90 = vector.load %arg19[%c0_31, %c0_32] : memref<8x8xf32, #tpu.memory_space<vmem>>, vector<8x8xf32>
    %cst_33 = arith.constant dense<0.000000e+00> : vector<8x8xf32>
    %91 = tpu.matmul %85, %80, %cst_33 {dimension_numbers = #tpu.dot_dimension_numbers<[0], [0], [1], [1], [0, 1, 1, 1], [], []>} : vector<16x8xf32>, vector<16x8xf32>, vector<8x8xf32> -> vector<8x8xf32>
    %92 = arith.addf %90, %91 : vector<8x8xf32>
    %c0_34 = arith.constant 0 : index
    %c0_35 = arith.constant 0 : index
    %93 = vector.load %arg19[%c0_34, %c0_35] : memref<8x8xf32, #tpu.memory_space<vmem>>, vector<8x8xf32>
    tpu.vector_store %arg19[%c0_34, %c0_35], %92 {strides = array<i32>} : memref<8x8xf32, #tpu.memory_space<vmem>>, vector<8x8xf32>,
    %c0_36 = arith.constant 0 : index
    %c0_37 = arith.constant 0 : index
    %94 = vector.load %arg20[%c0_36, %c0_37] : memref<2x8xf32, #tpu.memory_space<vmem>>, vector<2x8xf32>
    %cst_38 = arith.constant dense<0.000000e+00> : vector<2x8xf32>
    %95 = tpu.matmul %89, %80, %cst_38 {dimension_numbers = #tpu.dot_dimension_numbers<[0], [0], [1], [1], [0, 1, 1, 1], [], []>} : vector<16x2xf32>, vector<16x8xf32>, vector<2x8xf32> -> vector<2x8xf32>
    %96 = arith.addf %94, %95 : vector<2x8xf32>
    %c0_39 = arith.constant 0 : index
    %c0_40 = arith.constant 0 : index
    %97 = vector.load %arg20[%c0_39, %c0_40] : memref<2x8xf32, #tpu.memory_space<vmem>>, vector<2x8xf32>
    tpu.vector_store %arg20[%c0_39, %c0_40], %96 {strides = array<i32>} : memref<2x8xf32, #tpu.memory_space<vmem>>, vector<2x8xf32>,
    %c0_i32_41 = arith.constant 0 : i32
    %98 = arith.cmpi eq, %arg0, %c0_i32_41 : i32
    %99 = arith.extui %98 : i1 to i32
    %c0_i32_42 = arith.constant 0 : i32
    %100 = arith.cmpi ne, %99, %c0_i32_42 : i32
    scf.if %100 {
      %c0_43 = arith.constant 0 : index
      %c0_44 = arith.constant 0 : index
      %101 = vector.load %arg5[%c0_43, %c0_44] : memref<8x1xi32, #tpu.memory_space<vmem>>, vector<8x1xi32>
      %102 = tpu.iota {dimensions = array<i32: 1>} : vector<8x2xi32>
      %103 = vector.broadcast %101 : vector<8x1xi32> to vector<8x2xi32>
      %104 = arith.cmpi eq, %103, %102 : vector<8x2xi32>
      %105 = arith.extui %104 : vector<8x2xi1> to vector<8x2xi32>
      %106 = arith.sitofp %105 : vector<8x2xi32> to vector<8x2xf32>
      %c0_45 = arith.constant 0 : index
      %c0_46 = arith.constant 0 : index
      %107 = vector.load %arg9[%c0_45, %c0_46] : memref<16x64xf32, #tpu.memory_space<vmem>>, vector<4x64xf32>
      %c4 = arith.constant 4 : index
      %c0_47 = arith.constant 0 : index
      %108 = vector.load %arg9[%c4, %c0_47] : memref<16x64xf32, #tpu.memory_space<vmem>>, vector<8x64xf32>
      %c12 = arith.constant 12 : index
      %c0_48 = arith.constant 0 : index
      %109 = vector.load %arg9[%c12, %c0_48] : memref<16x64xf32, #tpu.memory_space<vmem>>, vector<3x64xf32>
      %c15 = arith.constant 15 : index
      %c0_49 = arith.constant 0 : index
      %110 = vector.load %arg9[%c15, %c0_49] : memref<16x64xf32, #tpu.memory_space<vmem>>, vector<1x64xf32>
      %c0_50 = arith.constant 0 : index
      %c0_51 = arith.constant 0 : index
      %111 = vector.load %arg4[%c0_50, %c0_51] : memref<2x3xf32, #tpu.memory_space<vmem>>, vector<2x3xf32>
      %cst_52 = arith.constant dense<0.000000e+00> : vector<8x3xf32>
      %112 = tpu.matmul %106, %111, %cst_52 {dimension_numbers = #tpu.dot_dimension_numbers<[1], [0], [0], [1], [0, 0, 1, 1], [], []>} : vector<8x2xf32>, vector<2x3xf32>, vector<8x3xf32> -> vector<8x3xf32>
      %c0_53 = arith.constant 0 : index
      %c0_54 = arith.constant 0 : index
      %113 = vector.load %arg3[%c0_53, %c0_54] : memref<8x4xf32, #tpu.memory_space<vmem>>, vector<8x4xf32>
      %cst_55 = arith.constant dense<0.000000e+00> : vector<8x64xf32>
      %114 = tpu.matmul %113, %107, %cst_55 {dimension_numbers = #tpu.dot_dimension_numbers<[1], [0], [0], [1], [0, 0, 1, 1], [], []>} : vector<8x4xf32>, vector<4x64xf32>, vector<8x64xf32> -> vector<8x64xf32>
      %c0_56 = arith.constant 0 : index
      %c0_57 = arith.constant 0 : index
      %115 = vector.load %arg19[%c0_56, %c0_57] : memref<8x8xf32, #tpu.memory_space<vmem>>, vector<8x8xf32>
      %cst_58 = arith.constant dense<0.000000e+00> : vector<8x64xf32>
      %116 = tpu.matmul %115, %108, %cst_58 {dimension_numbers = #tpu.dot_dimension_numbers<[1], [0], [0], [1], [0, 0, 1, 1], [], []>} : vector<8x8xf32>, vector<8x64xf32>, vector<8x64xf32> -> vector<8x64xf32>
      %117 = arith.addf %114, %116 : vector<8x64xf32>
      %cst_59 = arith.constant dense<0.000000e+00> : vector<8x64xf32>
      %118 = tpu.matmul %112, %109, %cst_59 {dimension_numbers = #tpu.dot_dimension_numbers<[1], [0], [0], [1], [0, 0, 1, 1], [], []>} : vector<8x3xf32>, vector<3x64xf32>, vector<8x64xf32> -> vector<8x64xf32>
      %119 = arith.addf %117, %118 : vector<8x64xf32>
      %120 = vector.broadcast %110 : vector<1x64xf32> to vector<8x64xf32>
      %121 = arith.addf %119, %120 : vector<8x64xf32>
      %cst_60 = arith.constant 0.000000e+00 : f32
      %122 = vector.broadcast %cst_60 : f32 to vector<8x64xf32>
      %123 = arith.maximumf %121, %122 : vector<8x64xf32>
      %c0_61 = arith.constant 0 : index
      %c0_62 = arith.constant 0 : index
      %124 = vector.load %arg10[%c0_61, %c0_62] : memref<67x8xf32, #tpu.memory_space<vmem>>, vector<64x8xf32>
      %c64_63 = arith.constant 64 : index
      %c0_64 = arith.constant 0 : index
      %125 = vector.load %arg10[%c64_63, %c0_64] : memref<67x8xf32, #tpu.memory_space<vmem>>, vector<1x8xf32>
      %c65_65 = arith.constant 65 : index
      %c0_66 = arith.constant 0 : index
      %126 = vector.load %arg10[%c65_65, %c0_66] : memref<67x8xf32, #tpu.memory_space<vmem>>, vector<1x8xf32>
      %c66_67 = arith.constant 66 : index
      %c0_68 = arith.constant 0 : index
      %127 = vector.load %arg10[%c66_67, %c0_68] : memref<67x8xf32, #tpu.memory_space<vmem>>, vector<1x8xf32>
      %cst_69 = arith.constant dense<0.000000e+00> : vector<8x8xf32>
      %128 = tpu.matmul %123, %124, %cst_69 {dimension_numbers = #tpu.dot_dimension_numbers<[1], [0], [0], [1], [0, 0, 1, 1], [], []>} : vector<8x64xf32>, vector<64x8xf32>, vector<8x8xf32> -> vector<8x8xf32>
      %129 = vector.broadcast %125 : vector<1x8xf32> to vector<8x8xf32>
      %130 = arith.addf %128, %129 : vector<8x8xf32>
      %cst_70 = arith.constant 0.000000e+00 : f32
      %131 = vector.broadcast %cst_70 : f32 to vector<8x8xf32>
      %132 = arith.maximumf %130, %131 : vector<8x8xf32>
      %cst_71 = arith.constant dense<0.000000e+00> : vector<8xf32>
      %133 = vector.multi_reduction <add>, %132, %cst_71 [1] : vector<8x8xf32> to vector<8xf32>
      %134 = vector.shape_cast %133 : vector<8xf32> to vector<8x1xf32>
      %cst_72 = arith.constant 8.000000e+00 : f32
      %135 = vector.broadcast %cst_72 : f32 to vector<8x1xf32>
      %136 = arith.divf %134, %135 : vector<8x1xf32>
      %137 = vector.broadcast %136 : vector<8x1xf32> to vector<8x8xf32>
      %138 = arith.subf %132, %137 : vector<8x8xf32>
      %139 = arith.mulf %138, %138 : vector<8x8xf32>
      %cst_73 = arith.constant dense<0.000000e+00> : vector<8xf32>
      %140 = vector.multi_reduction <add>, %139, %cst_73 [1] : vector<8x8xf32> to vector<8xf32>
      %141 = vector.shape_cast %140 : vector<8xf32> to vector<8x1xf32>
      %cst_74 = arith.constant 8.000000e+00 : f32
      %142 = vector.broadcast %cst_74 : f32 to vector<8x1xf32>
      %143 = arith.divf %141, %142 : vector<8x1xf32>
      %144 = vector.broadcast %136 : vector<8x1xf32> to vector<8x8xf32>
      %145 = arith.subf %132, %144 : vector<8x8xf32>
      %cst_75 = arith.constant 9.99999974E-6 : f32
      %146 = vector.broadcast %cst_75 : f32 to vector<8x1xf32>
      %147 = arith.addf %143, %146 : vector<8x1xf32>
      %148 = math.rsqrt %147 : vector<8x1xf32>
      %149 = vector.broadcast %148 : vector<8x1xf32> to vector<8x8xf32>
      %150 = arith.mulf %145, %149 : vector<8x8xf32>
      %151 = vector.broadcast %126 : vector<1x8xf32> to vector<8x8xf32>
      %152 = arith.mulf %150, %151 : vector<8x8xf32>
      %153 = vector.broadcast %127 : vector<1x8xf32> to vector<8x8xf32>
      %154 = arith.addf %152, %153 : vector<8x8xf32>
      %c0_76 = arith.constant 0 : index
      %c0_77 = arith.constant 0 : index
      %155 = vector.load %arg14[%c0_76, %c0_77] : memref<8x8xf32, #tpu.memory_space<vmem>>, vector<8x8xf32>
      tpu.vector_store %arg14[%c0_76, %c0_77], %154 {strides = array<i32>} : memref<8x8xf32, #tpu.memory_space<vmem>>, vector<8x8xf32>,
      %c0_78 = arith.constant 0 : index
      %c0_79 = arith.constant 0 : index
      %156 = vector.load %arg6[%c0_78, %c0_79] : memref<2x2xf32, #tpu.memory_space<vmem>>, vector<2x1xf32>
      %c0_80 = arith.constant 0 : index
      %c1_81 = arith.constant 1 : index
      %157 = vector.load %arg6[%c0_80, %c1_81] : memref<2x2xf32, #tpu.memory_space<vmem>>, vector<2x1xf32>
      %cst_82 = arith.constant dense<0.000000e+00> : vector<2x8xf32>
      %158 = tpu.matmul %106, %154, %cst_82 {dimension_numbers = #tpu.dot_dimension_numbers<[0], [0], [1], [1], [0, 1, 1, 1], [], []>} : vector<8x2xf32>, vector<8x8xf32>, vector<2x8xf32> -> vector<2x8xf32>
      %cst_83 = arith.constant 1.000000e+00 : f32
      %159 = vector.broadcast %cst_83 : f32 to vector<2x1xf32>
      %160 = arith.maximumf %157, %159 : vector<2x1xf32>
      %161 = vector.broadcast %160 : vector<2x1xf32> to vector<2x8xf32>
      %162 = arith.divf %158, %161 : vector<2x8xf32>
      %c0_84 = arith.constant 0 : index
      %c0_85 = arith.constant 0 : index
      %163 = vector.load %arg20[%c0_84, %c0_85] : memref<2x8xf32, #tpu.memory_space<vmem>>, vector<2x8xf32>
      %cst_86 = arith.constant 1.000000e+00 : f32
      %164 = vector.broadcast %cst_86 : f32 to vector<2x1xf32>
      %165 = arith.maximumf %156, %164 : vector<2x1xf32>
      %166 = vector.broadcast %165 : vector<2x1xf32> to vector<2x8xf32>
      %167 = arith.divf %163, %166 : vector<2x8xf32>
      %c0_87 = arith.constant 0 : index
      %c0_88 = arith.constant 0 : index
      %168 = vector.load %arg11[%c0_87, %c0_88] : memref<20x64xf32, #tpu.memory_space<vmem>>, vector<3x64xf32>
      %c3 = arith.constant 3 : index
      %c0_89 = arith.constant 0 : index
      %169 = vector.load %arg11[%c3, %c0_89] : memref<20x64xf32, #tpu.memory_space<vmem>>, vector<8x64xf32>
      %c11 = arith.constant 11 : index
      %c0_90 = arith.constant 0 : index
      %170 = vector.load %arg11[%c11, %c0_90] : memref<20x64xf32, #tpu.memory_space<vmem>>, vector<8x64xf32>
      %c19 = arith.constant 19 : index
      %c0_91 = arith.constant 0 : index
      %171 = vector.load %arg11[%c19, %c0_91] : memref<20x64xf32, #tpu.memory_space<vmem>>, vector<1x64xf32>
      %c0_92 = arith.constant 0 : index
      %c0_93 = arith.constant 0 : index
      %172 = vector.load %arg4[%c0_92, %c0_93] : memref<2x3xf32, #tpu.memory_space<vmem>>, vector<2x3xf32>
      %cst_94 = arith.constant dense<0.000000e+00> : vector<2x64xf32>
      %173 = tpu.matmul %172, %168, %cst_94 {dimension_numbers = #tpu.dot_dimension_numbers<[1], [0], [0], [1], [0, 0, 1, 1], [], []>} : vector<2x3xf32>, vector<3x64xf32>, vector<2x64xf32> -> vector<2x64xf32>
      %cst_95 = arith.constant dense<0.000000e+00> : vector<2x64xf32>
      %174 = tpu.matmul %162, %169, %cst_95 {dimension_numbers = #tpu.dot_dimension_numbers<[1], [0], [0], [1], [0, 0, 1, 1], [], []>} : vector<2x8xf32>, vector<8x64xf32>, vector<2x64xf32> -> vector<2x64xf32>
      %175 = arith.addf %173, %174 : vector<2x64xf32>
      %cst_96 = arith.constant dense<0.000000e+00> : vector<2x64xf32>
      %176 = tpu.matmul %167, %170, %cst_96 {dimension_numbers = #tpu.dot_dimension_numbers<[1], [0], [0], [1], [0, 0, 1, 1], [], []>} : vector<2x8xf32>, vector<8x64xf32>, vector<2x64xf32> -> vector<2x64xf32>
      %177 = arith.addf %175, %176 : vector<2x64xf32>
      %178 = vector.broadcast %171 : vector<1x64xf32> to vector<2x64xf32>
      %179 = arith.addf %177, %178 : vector<2x64xf32>
      %cst_97 = arith.constant 0.000000e+00 : f32
      %180 = vector.broadcast %cst_97 : f32 to vector<2x64xf32>
      %181 = arith.maximumf %179, %180 : vector<2x64xf32>
      %c0_98 = arith.constant 0 : index
      %c0_99 = arith.constant 0 : index
      %182 = vector.load %arg12[%c0_98, %c0_99] : memref<67x8xf32, #tpu.memory_space<vmem>>, vector<64x8xf32>
      %c64_100 = arith.constant 64 : index
      %c0_101 = arith.constant 0 : index
      %183 = vector.load %arg12[%c64_100, %c0_101] : memref<67x8xf32, #tpu.memory_space<vmem>>, vector<1x8xf32>
      %c65_102 = arith.constant 65 : index
      %c0_103 = arith.constant 0 : index
      %184 = vector.load %arg12[%c65_102, %c0_103] : memref<67x8xf32, #tpu.memory_space<vmem>>, vector<1x8xf32>
      %c66_104 = arith.constant 66 : index
      %c0_105 = arith.constant 0 : index
      %185 = vector.load %arg12[%c66_104, %c0_105] : memref<67x8xf32, #tpu.memory_space<vmem>>, vector<1x8xf32>
      %cst_106 = arith.constant dense<0.000000e+00> : vector<2x8xf32>
      %186 = tpu.matmul %181, %182, %cst_106 {dimension_numbers = #tpu.dot_dimension_numbers<[1], [0], [0], [1], [0, 0, 1, 1], [], []>} : vector<2x64xf32>, vector<64x8xf32>, vector<2x8xf32> -> vector<2x8xf32>
      %187 = vector.broadcast %183 : vector<1x8xf32> to vector<2x8xf32>
      %188 = arith.addf %186, %187 : vector<2x8xf32>
      %cst_107 = arith.constant 0.000000e+00 : f32
      %189 = vector.broadcast %cst_107 : f32 to vector<2x8xf32>
      %190 = arith.maximumf %188, %189 : vector<2x8xf32>
      %cst_108 = arith.constant dense<0.000000e+00> : vector<2xf32>
      %191 = vector.multi_reduction <add>, %190, %cst_108 [1] : vector<2x8xf32> to vector<2xf32>
      %192 = vector.shape_cast %191 : vector<2xf32> to vector<2x1xf32>
      %cst_109 = arith.constant 8.000000e+00 : f32
      %193 = vector.broadcast %cst_109 : f32 to vector<2x1xf32>
      %194 = arith.divf %192, %193 : vector<2x1xf32>
      %195 = vector.broadcast %194 : vector<2x1xf32> to vector<2x8xf32>
      %196 = arith.subf %190, %195 : vector<2x8xf32>
      %197 = arith.mulf %196, %196 : vector<2x8xf32>
      %cst_110 = arith.constant dense<0.000000e+00> : vector<2xf32>
      %198 = vector.multi_reduction <add>, %197, %cst_110 [1] : vector<2x8xf32> to vector<2xf32>
      %199 = vector.shape_cast %198 : vector<2xf32> to vector<2x1xf32>
      %cst_111 = arith.constant 8.000000e+00 : f32
      %200 = vector.broadcast %cst_111 : f32 to vector<2x1xf32>
      %201 = arith.divf %199, %200 : vector<2x1xf32>
      %202 = vector.broadcast %194 : vector<2x1xf32> to vector<2x8xf32>
      %203 = arith.subf %190, %202 : vector<2x8xf32>
      %cst_112 = arith.constant 9.99999974E-6 : f32
      %204 = vector.broadcast %cst_112 : f32 to vector<2x1xf32>
      %205 = arith.addf %201, %204 : vector<2x1xf32>
      %206 = math.rsqrt %205 : vector<2x1xf32>
      %207 = vector.broadcast %206 : vector<2x1xf32> to vector<2x8xf32>
      %208 = arith.mulf %203, %207 : vector<2x8xf32>
      %209 = vector.broadcast %184 : vector<1x8xf32> to vector<2x8xf32>
      %210 = arith.mulf %208, %209 : vector<2x8xf32>
      %211 = vector.broadcast %185 : vector<1x8xf32> to vector<2x8xf32>
      %212 = arith.addf %210, %211 : vector<2x8xf32>
      %c0_113 = arith.constant 0 : index
      %c0_114 = arith.constant 0 : index
      %213 = vector.load %arg15[%c0_113, %c0_114] : memref<2x8xf32, #tpu.memory_space<vmem>>, vector<2x8xf32>
      tpu.vector_store %arg15[%c0_113, %c0_114], %212 {strides = array<i32>} : memref<2x8xf32, #tpu.memory_space<vmem>>, vector<2x8xf32>,
    } else {
    }
    return
  }
  func.func @transform_0(%arg0: i32) -> (i32, i32) {
    %c0_i32 = arith.constant 0 : i32
    %c0_i32_0 = arith.constant 0 : i32
    return %arg0, %c0_i32 : i32, i32
  }
  func.func @transform_1(%arg0: i32) -> (i32, i32) {
    %c0_i32 = arith.constant 0 : i32
    %c0_i32_0 = arith.constant 0 : i32
    return %arg0, %c0_i32 : i32, i32
  }
  func.func @transform_2(%arg0: i32) -> (i32, i32) {
    %c0_i32 = arith.constant 0 : i32
    %c0_i32_0 = arith.constant 0 : i32
    %c0_i32_1 = arith.constant 0 : i32
    return %c0_i32, %c0_i32_0 : i32, i32
  }
  func.func @transform_3(%arg0: i32) -> (i32, i32) {
    %c0_i32 = arith.constant 0 : i32
    %c0_i32_0 = arith.constant 0 : i32
    %c0_i32_1 = arith.constant 0 : i32
    return %c0_i32, %c0_i32_0 : i32, i32
  }
  func.func @transform_4(%arg0: i32) -> (i32, i32) {
    %c0_i32 = arith.constant 0 : i32
    %c0_i32_0 = arith.constant 0 : i32
    %c0_i32_1 = arith.constant 0 : i32
    return %c0_i32, %c0_i32_0 : i32, i32
  }
  func.func @transform_5(%arg0: i32) -> (i32, i32) {
    %c0_i32 = arith.constant 0 : i32
    %c0_i32_0 = arith.constant 0 : i32
    %c0_i32_1 = arith.constant 0 : i32
    return %c0_i32, %c0_i32_0 : i32, i32
  }
  func.func @transform_6(%arg0: i32) -> (i32, i32) {
    %c0_i32 = arith.constant 0 : i32
    %c0_i32_0 = arith.constant 0 : i32
    %c0_i32_1 = arith.constant 0 : i32
    return %c0_i32, %c0_i32_0 : i32, i32
  }
  func.func @transform_7(%arg0: i32) -> (i32, i32) {
    %c0_i32 = arith.constant 0 : i32
    %c0_i32_0 = arith.constant 0 : i32
    %c0_i32_1 = arith.constant 0 : i32
    return %c0_i32, %c0_i32_0 : i32, i32
  }
  func.func @transform_8(%arg0: i32) -> (i32, i32) {
    %c0_i32 = arith.constant 0 : i32
    %c0_i32_0 = arith.constant 0 : i32
    %c0_i32_1 = arith.constant 0 : i32
    return %c0_i32, %c0_i32_0 : i32, i32
  }
  func.func @transform_9(%arg0: i32) -> (i32, i32) {
    %c0_i32 = arith.constant 0 : i32
    %c0_i32_0 = arith.constant 0 : i32
    %c0_i32_1 = arith.constant 0 : i32
    return %c0_i32, %c0_i32_0 : i32, i32
  }
  func.func @transform_10(%arg0: i32) -> (i32, i32) {
    %c0_i32 = arith.constant 0 : i32
    %c0_i32_0 = arith.constant 0 : i32
    %c0_i32_1 = arith.constant 0 : i32
    return %c0_i32, %c0_i32_0 : i32, i32
  }
  func.func @transform_11(%arg0: i32) -> (i32, i32) {
    %c0_i32 = arith.constant 0 : i32
    %c0_i32_0 = arith.constant 0 : i32
    %c0_i32_1 = arith.constant 0 : i32
    return %c0_i32, %c0_i32_0 : i32, i32
  }
  func.func @transform_12(%arg0: i32) -> (i32, i32) {
    %c0_i32 = arith.constant 0 : i32
    %c0_i32_0 = arith.constant 0 : i32
    return %arg0, %c0_i32 : i32, i32
  }
  func.func @transform_13(%arg0: i32) -> (i32, i32) {
    %c0_i32 = arith.constant 0 : i32
    %c0_i32_0 = arith.constant 0 : i32
    %c0_i32_1 = arith.constant 0 : i32
    return %c0_i32, %c0_i32_0 : i32, i32
  }
  func.func @transform_14(%arg0: i32) -> (i32, i32) {
    %c0_i32 = arith.constant 0 : i32
    %c0_i32_0 = arith.constant 0 : i32
    %c0_i32_1 = arith.constant 0 : i32
    return %c0_i32, %c0_i32_0 : i32, i32
  }
}

</mosaic_0001>

<llo_original>
// kernel: graphnet_forward.1
$region0: #{graphnet_forward.1}
  #allocation0 [shape = 'u32[]', space=smem, size = 0x4, offset = 0x4, fixed_abs, tag = 'smem constant byte address 0x4 - core index']
  #allocation1 [shape = 'u32[144,128]{1,0:T(1,128)}', space=vmem, size = 0x12000, scoped, tag = 'internal scratch']
  #allocation2 [shape = 'bf16[8,64]{1,0:T(8,128)(2,1)}', space=vmem, size = 0x800, scoped, tag = 'scratch operand']
  #allocation3 [shape = 'bf16[8,64]{1,0:T(8,128)(2,1)}', space=vmem, size = 0x800, scoped, tag = 'scratch operand']
  #allocation4 [shape = 'bf16[2,64]{1,0:T(2,128)(2,1)}', space=vmem, size = 0x200, scoped, tag = 'scratch operand']
  #allocation5 [shape = 'f32[8,8]{1,0:T(8,128)}', space=vmem, size = 0x1000, scoped, tag = 'scratch operand']
  #allocation6 [shape = 'f32[2,8]{1,0:T(2,128)}', space=vmem, size = 0x400, scoped, tag = 'scratch operand']
  %s0 = inlined_call_operand.vmem [shape: f32[16,2], index: 0, kind: input, shape index: {}]
  %s1 = inlined_call_operand.vmem [shape: s32[16,3], index: 1, kind: input, shape index: {}]
  %s2 = inlined_call_operand.vmem [shape: f32[8,4], index: 2, kind: input, shape index: {}]
  %s3 = inlined_call_operand.vmem [shape: f32[2,3], index: 3, kind: input, shape index: {}]
  %s4 = inlined_call_operand.vmem [shape: s32[8,1], index: 4, kind: input, shape index: {}]
  %s5 = inlined_call_operand.vmem [shape: f32[2,2], index: 5, kind: input, shape index: {}]
  %s6 = inlined_call_operand.vmem [shape: f32[14,64], index: 6, kind: input, shape index: {}]
  %s7 = inlined_call_operand.vmem [shape: f32[67,8], index: 7, kind: input, shape index: {}]
  %s8 = inlined_call_operand.vmem [shape: f32[16,64], index: 8, kind: input, shape index: {}]
  %s9 = inlined_call_operand.vmem [shape: f32[67,8], index: 9, kind: input, shape index: {}]
  %s10 = inlined_call_operand.vmem [shape: f32[20,64], index: 10, kind: input, shape index: {}]
  %s11 = inlined_call_operand.vmem [shape: f32[67,8], index: 11, kind: input, shape index: {}]
  %s12 = inlined_call_operand.vmem [shape: f32[16,8], index: 12, kind: output, shape index: {0}]
  %s13 = inlined_call_operand.hbm [shape: f32[8,8], index: 13, kind: output, shape index: {1}]
  %s14 = inlined_call_operand.hbm [shape: f32[2,8], index: 14, kind: output, shape index: {2}]
  %15 = xla_tuple %s12, %s13, %s14
  %s16 = sld [smem:[#allocation0]]
  $region82: #{graphnet_forward.1} parent=0
    _
  %s18 = ssub.s32 1, %s16
  %s19 = scalar_select 0, %s18, %s16
  $region1: #{graphnet_forward.1} parent=0
    #allocation7 [shape = 'u8[4096]{0}', space=vmem, size = 0x1000, scoped, tag = 'output window, operand 1, single buffered']
    #allocation8 [shape = 's32[1]{0}', space=sflag, size = 0x4, scoped, tag = 'scoped memory for graphnet_forward.1']
    #allocation9 [shape = 'u8[1024]{0}', space=vmem, size = 0x400, scoped, tag = 'output window, operand 2, single buffered']
    #allocation10 [shape = 's32[1]{0}', space=sflag, size = 0x4, scoped, tag = 'scoped memory for graphnet_forward.1']
    %20 = vsyncpa [#allocation8], 0
    %21 = vsyncpa [#allocation10], 0
    // Predicated region
    $region2: #{graphnet_forward.1} parent=1 // pred_check
      _
    $region3: #{graphnet_forward.1} parent=1 // pred_check_branch
      %23 = sbr.rel (0) target = $region5
    $region4: #{graphnet_forward.1} parent=1 // pred_region
      _
    $region5: #{graphnet_forward.1} parent=1 // pred_fallthru
      _
    // Predicated region
    $region6: #{graphnet_forward.1} parent=1 // pred_check
      _
    $region7: #{graphnet_forward.1} parent=1 // pred_check_branch
      %25 = sbr.rel (0) target = $region9
    $region8: #{graphnet_forward.1} parent=1 // pred_region
      _
    $region9: #{graphnet_forward.1} parent=1 // pred_fallthru
      _
    // Predicated region
    $region10: #{graphnet_forward.1} parent=1 // pred_check
      _
    $region11: #{graphnet_forward.1} parent=1 // pred_check_branch
      %27 = sbr.rel (0) target = $region13
    $region12: #{graphnet_forward.1} parent=1 // pred_region
      _
    $region13: #{graphnet_forward.1} parent=1 // pred_fallthru
      _
    // Predicated region
    $region14: #{graphnet_forward.1} parent=1 // pred_check
      _
    $region15: #{graphnet_forward.1} parent=1 // pred_check_branch
      %29 = sbr.rel (0) target = $region17
    $region16: #{graphnet_forward.1} parent=1 // pred_region
      _
    $region17: #{graphnet_forward.1} parent=1 // pred_fallthru
      _
    // Predicated region
    $region18: #{graphnet_forward.1} parent=1 // pred_check
      _
    $region19: #{graphnet_forward.1} parent=1 // pred_check_branch
      %31 = sbr.rel (0) target = $region21
    $region20: #{graphnet_forward.1} parent=1 // pred_region
      _
    $region21: #{graphnet_forward.1} parent=1 // pred_fallthru
      _
    // Predicated region
    $region22: #{graphnet_forward.1} parent=1 // pred_check
      _
    $region23: #{graphnet_forward.1} parent=1 // pred_check_branch
      %33 = sbr.rel (0) target = $region25
    $region24: #{graphnet_forward.1} parent=1 // pred_region
      _
    $region25: #{graphnet_forward.1} parent=1 // pred_fallthru
      _
    // Predicated region
    $region26: #{graphnet_forward.1} parent=1 // pred_check
      _
    $region27: #{graphnet_forward.1} parent=1 // pred_check_branch
      %35 = sbr.rel (0) target = $region29
    $region28: #{graphnet_forward.1} parent=1 // pred_region
      _
    $region29: #{graphnet_forward.1} parent=1 // pred_fallthru
      _
    // Predicated region
    $region30: #{graphnet_forward.1} parent=1 // pred_check
      _
    $region31: #{graphnet_forward.1} parent=1 // pred_check_branch
      %37 = sbr.rel (0) target = $region33
    $region32: #{graphnet_forward.1} parent=1 // pred_region
      _
    $region33: #{graphnet_forward.1} parent=1 // pred_fallthru
      _
    // Predicated region
    $region34: #{graphnet_forward.1} parent=1 // pred_check
      _
    $region35: #{graphnet_forward.1} parent=1 // pred_check_branch
      %39 = sbr.rel (0) target = $region37
    $region36: #{graphnet_forward.1} parent=1 // pred_region
      _
    $region37: #{graphnet_forward.1} parent=1 // pred_fallthru
      _
    // Predicated region
    $region38: #{graphnet_forward.1} parent=1 // pred_check
      _
    $region39: #{graphnet_forward.1} parent=1 // pred_check_branch
      %41 = sbr.rel (0) target = $region41
    $region40: #{graphnet_forward.1} parent=1 // pred_region
      _
    $region41: #{graphnet_forward.1} parent=1 // pred_fallthru
      _
    // Predicated region
    $region42: #{graphnet_forward.1} parent=1 // pred_check
      _
    $region43: #{graphnet_forward.1} parent=1 // pred_check_branch
      %43 = sbr.rel (0) target = $region45
    $region44: #{graphnet_forward.1} parent=1 // pred_region
      _
    $region45: #{graphnet_forward.1} parent=1 // pred_fallthru
      _
    // Predicated region
    $region46: #{graphnet_forward.1} parent=1 // pred_check
      _
    $region47: #{graphnet_forward.1} parent=1 // pred_check_branch
      %45 = sbr.rel (0) target = $region49
    $region48: #{graphnet_forward.1} parent=1 // pred_region
      _
    $region49: #{graphnet_forward.1} parent=1 // pred_fallthru
      _
    %p47 = scmp.eq.s32.totalorder 0, 0
    // Predicated region
    $region50: #{graphnet_forward.1} parent=1 // pred_check
      %p48 = pneg %p47
    $region51: #{graphnet_forward.1} parent=1 // pred_check_branch
      %50 = sbr.rel (%p48) target = $region53
    $region52: #{graphnet_forward.1} parent=1 // pred_region
      %v51 = vld [vmem:[%s2] sm:$0xff]
      %v52 = vld [vmem:[%s6] sm:$0xf]
      %vm53 = vcmask 31744
      %v55 = vsel %vm53, %v51, 0
      %vm57 = vcmask 1043456
      %v59 = vsel %vm57, %v52, 0
      %61 = vmatprep.subr.mxu0 0.0
      %62 = vmatpush1.msra.mxu0 0.0
      %63 = vmatprep.subr.mxu0 0.0
      %64 = vmatpush1.msra.mxu0 0.0
      %65 = vmatprep.subr.mxu0 0.0
      %66 = vmatpush1.msra.mxu0 0.0
      %67 = vmatprep.subr.mxu0 0.0
      %68 = vmatpush1.msra.mxu0 0.0
      %69 = vmatprep.subr.mxu0 0.0
      %70 = vmatpush1.msra.mxu0 0.0
      %71 = vmatprep.subr.mxu0 0.0
      %72 = vmatpush1.msra.mxu0 0.0
      %73 = vmatprep.subr.mxu0 0.0
      %74 = vmatpush1.msra.mxu0 0.0
      %75 = vmatprep.subr.mxu0 0.0
      %76 = vmatpush1.msra.mxu0 0.0
      %77 = vmatprep.subr.mxu0 0.0
      %78 = vmatpush1.msra.mxu0 0.0
      %79 = vmatprep.subr.mxu0 0.0
      %80 = vmatpush1.msra.mxu0 0.0
      %81 = vmatprep.subr.mxu0 0.0
      %82 = vmatpush1.msra.mxu0 0.0
      %83 = vmatprep.subr.mxu0 0.0
      %84 = vmatpush1.msra.mxu0 0.0
      %85 = vmatprep.subr.mxu0 0.0
      %86 = vmatpush1.msra.mxu0 0.0
      %87 = vmatprep.subr.mxu0 0.0
      %88 = vmatpush1.msra.mxu0 0.0
      %89 = vmatprep.subr.mxu0 0.0
      %90 = vmatpush1.msra.mxu0 0.0
      %91 = vmatprep.subr.mxu0 0.0
      %92 = vmatpush1.msra.mxu0 %v59
      %93 = vmatprep.subr.mxu0 0.0
      %94 = vmatpush2.msra.mxu0 0.0
      %95 = vmatprep.subr.mxu0 0.0
      %96 = vmatpush2.msra.mxu0 0.0
      %97 = vmatprep.subr.mxu0 0.0
      %98 = vmatpush2.msra.mxu0 0.0
      %99 = vmatprep.subr.mxu0 0.0
      %100 = vmatpush2.msra.mxu0 0.0
      %101 = vmatprep.subr.mxu0 0.0
      %102 = vmatpush2.msra.mxu0 0.0
      %103 = vmatprep.subr.mxu0 0.0
      %104 = vmatpush2.msra.mxu0 0.0
      %105 = vmatprep.subr.mxu0 0.0
      %106 = vmatpush2.msra.mxu0 0.0
      %107 = vmatprep.subr.mxu0 0.0
      %108 = vmatpush2.msra.mxu0 0.0
      %109 = vmatprep.subr.mxu0 0.0
      %110 = vmatpush2.msra.mxu0 0.0
      %111 = vmatprep.subr.mxu0 0.0
      %112 = vmatpush2.msra.mxu0 0.0
      %113 = vmatprep.subr.mxu0 0.0
      %114 = vmatpush2.msra.mxu0 0.0
      %115 = vmatprep.subr.mxu0 0.0
      %116 = vmatpush2.msra.mxu0 0.0
      %117 = vmatprep.subr.mxu0 0.0
      %118 = vmatpush2.msra.mxu0 0.0
      %119 = vmatprep.subr.mxu0 0.0
      %120 = vmatpush2.msra.mxu0 0.0
      %121 = vmatprep.subr.mxu0 0.0
      %122 = vmatpush2.msra.mxu0 0.0
      %123 = vmatprep.subr.mxu0 0.0
      %124 = vmatpush2.msra.mxu0 0.0
      %125 = vmatprep.mubr.f32.mxu0 0.0
      %126 = vmatmul.mubr.f32.gmra.mxu0 %v55
      %v127 = vpop.f32.mrf.mxu0
      %v128 = vadd.f32 0.0, %v127
      %v129 = vpop.f32.mrf.mxu0
      %130 = vdwg.mxu0
      %v131 = vpack.c.bf16 %v128, %v128
      %vm132 = vcmask 519168
      %133 = vst.msk [vmem:[#allocation2] sm:$0xf] %vm132, %v131
      %v134 = vld [vmem:[%s2] sm:$0xff]
      %v135 = vld [vmem:[%s6 + $0x4] sm:$0xf]
      %v137 = vsel %vm53, %v134, 0
      %v140 = vsel %vm57, %v135, 0
      %142 = vmatprep.subr.mxu0 0.0
      %143 = vmatpush1.msra.mxu0 0.0
      %144 = vmatprep.subr.mxu0 0.0
      %145 = vmatpush1.msra.mxu0 0.0
      %146 = vmatprep.subr.mxu0 0.0
      %147 = vmatpush1.msra.mxu0 0.0
      %148 = vmatprep.subr.mxu0 0.0
      %149 = vmatpush1.msra.mxu0 0.0
      %150 = vmatprep.subr.mxu0 0.0
      %151 = vmatpush1.msra.mxu0 0.0
      %152 = vmatprep.subr.mxu0 0.0
      %153 = vmatpush1.msra.mxu0 0.0
      %154 = vmatprep.subr.mxu0 0.0
      %155 = vmatpush1.msra.mxu0 0.0
      %156 = vmatprep.subr.mxu0 0.0
      %157 = vmatpush1.msra.mxu0 0.0
      %158 = vmatprep.subr.mxu0 0.0
      %159 = vmatpush1.msra.mxu0 0.0
      %160 = vmatprep.subr.mxu0 0.0
      %161 = vmatpush1.msra.mxu0 0.0
      %162 = vmatprep.subr.mxu0 0.0
      %163 = vmatpush1.msra.mxu0 0.0
      %164 = vmatprep.subr.mxu0 0.0
      %165 = vmatpush1.msra.mxu0 0.0
      %166 = vmatprep.subr.mxu0 0.0
      %167 = vmatpush1.msra.mxu0 0.0
      %168 = vmatprep.subr.mxu0 0.0
      %169 = vmatpush1.msra.mxu0 0.0
      %170 = vmatprep.subr.mxu0 0.0
      %171 = vmatpush1.msra.mxu0 0.0
      %172 = vmatprep.subr.mxu0 0.0
      %173 = vmatpush1.msra.mxu0 %v140
      %174 = vmatprep.subr.mxu0 0.0
      %175 = vmatpush2.msra.mxu0 0.0
      %176 = vmatprep.subr.mxu0 0.0
      %177 = vmatpush2.msra.mxu0 0.0
      %178 = vmatprep.subr.mxu0 0.0
      %179 = vmatpush2.msra.mxu0 0.0
      %180 = vmatprep.subr.mxu0 0.0
      %181 = vmatpush2.msra.mxu0 0.0
      %182 = vmatprep.subr.mxu0 0.0
      %183 = vmatpush2.msra.mxu0 0.0
      %184 = vmatprep.subr.mxu0 0.0
      %185 = vmatpush2.msra.mxu0 0.0
      %186 = vmatprep.subr.mxu0 0.0
      %187 = vmatpush2.msra.mxu0 0.0
      %188 = vmatprep.subr.mxu0 0.0
      %189 = vmatpush2.msra.mxu0 0.0
      %190 = vmatprep.subr.mxu0 0.0
      %191 = vmatpush2.msra.mxu0 0.0
      %192 = vmatprep.subr.mxu0 0.0
      %193 = vmatpush2.msra.mxu0 0.0
      %194 = vmatprep.subr.mxu0 0.0
      %195 = vmatpush2.msra.mxu0 0.0
      %196 = vmatprep.subr.mxu0 0.0
      %197 = vmatpush2.msra.mxu0 0.0
      %198 = vmatprep.subr.mxu0 0.0
      %199 = vmatpush2.msra.mxu0 0.0
      %200 = vmatprep.subr.mxu0 0.0
      %201 = vmatpush2.msra.mxu0 0.0
      %202 = vmatprep.subr.mxu0 0.0
      %203 = vmatpush2.msra.mxu0 0.0
      %204 = vmatprep.subr.mxu0 0.0
      %205 = vmatpush2.msra.mxu0 0.0
      %206 = vmatprep.mubr.f32.mxu0 0.0
      %207 = vmatmul.mubr.f32.gmra.mxu0 %v137
      %v208 = vpop.f32.mrf.mxu0
      %v209 = vadd.f32 0.0, %v208
      %v210 = vpop.f32.mrf.mxu0
      %211 = vdwg.mxu0
      %v212 = vpack.c.bf16 %v209, %v209
      %213 = vst.msk [vmem:[#allocation3] sm:$0xf] %vm132, %v212
      %v214 = vld [vmem:[%s3] sm:$0x3]
      %v215 = vld [vmem:[%s6 + $0xa] sm:$0x7]
      %vm216 = vcmask 23552
      %v218 = vsel %vm216, %v214, 0
      %vm220 = vcmask 1042432
      %v222 = vsel %vm220, %v215, 0
      %224 = vmatprep.subr.mxu0 0.0
      %225 = vmatpush1.msra.mxu0 0.0
      %226 = vmatprep.subr.mxu0 0.0
      %227 = vmatpush1.msra.mxu0 0.0
      %228 = vmatprep.subr.mxu0 0.0
      %229 = vmatpush1.msra.mxu0 0.0
      %230 = vmatprep.subr.mxu0 0.0
      %231 = vmatpush1.msra.mxu0 0.0
      %232 = vmatprep.subr.mxu0 0.0
      %233 = vmatpush1.msra.mxu0 0.0
      %234 = vmatprep.subr.mxu0 0.0
      %235 = vmatpush1.msra.mxu0 0.0
      %236 = vmatprep.subr.mxu0 0.0
      %237 = vmatpush1.msra.mxu0 0.0
      %238 = vmatprep.subr.mxu0 0.0
      %239 = vmatpush1.msra.mxu0 0.0
      %240 = vmatprep.subr.mxu0 0.0
      %241 = vmatpush1.msra.mxu0 0.0
      %242 = vmatprep.subr.mxu0 0.0
      %243 = vmatpush1.msra.mxu0 0.0
      %244 = vmatprep.subr.mxu0 0.0
      %245 = vmatpush1.msra.mxu0 0.0
      %246 = vmatprep.subr.mxu0 0.0
      %247 = vmatpush1.msra.mxu0 0.0
      %248 = vmatprep.subr.mxu0 0.0
      %249 = vmatpush1.msra.mxu0 0.0
      %250 = vmatprep.subr.mxu0 0.0
      %251 = vmatpush1.msra.mxu0 0.0
      %252 = vmatprep.subr.mxu0 0.0
      %253 = vmatpush1.msra.mxu0 0.0
      %254 = vmatprep.subr.mxu0 0.0
      %255 = vmatpush1.msra.mxu0 %v222
      %256 = vmatprep.subr.mxu0 0.0
      %257 = vmatpush2.msra.mxu0 0.0
      %258 = vmatprep.subr.mxu0 0.0
      %259 = vmatpush2.msra.mxu0 0.0
      %260 = vmatprep.subr.mxu0 0.0
      %261 = vmatpush2.msra.mxu0 0.0
      %262 = vmatprep.subr.mxu0 0.0
      %263 = vmatpush2.msra.mxu0 0.0
      %264 = vmatprep.subr.mxu0 0.0
      %265 = vmatpush2.msra.mxu0 0.0
      %266 = vmatprep.subr.mxu0 0.0
      %267 = vmatpush2.msra.mxu0 0.0
      %268 = vmatprep.subr.mxu0 0.0
      %269 = vmatpush2.msra.mxu0 0.0
      %270 = vmatprep.subr.mxu0 0.0
      %271 = vmatpush2.msra.mxu0 0.0
      %272 = vmatprep.subr.mxu0 0.0
      %273 = vmatpush2.msra.mxu0 0.0
      %274 = vmatprep.subr.mxu0 0.0
      %275 = vmatpush2.msra.mxu0 0.0
      %276 = vmatprep.subr.mxu0 0.0
      %277 = vmatpush2.msra.mxu0 0.0
      %278 = vmatprep.subr.mxu0 0.0
      %279 = vmatpush2.msra.mxu0 0.0
      %280 = vmatprep.subr.mxu0 0.0
      %281 = vmatpush2.msra.mxu0 0.0
      %282 = vmatprep.subr.mxu0 0.0
      %283 = vmatpush2.msra.mxu0 0.0
      %284 = vmatprep.subr.mxu0 0.0
      %285 = vmatpush2.msra.mxu0 0.0
      %286 = vmatprep.subr.mxu0 0.0
      %287 = vmatpush2.msra.mxu0 0.0
      %288 = vmatprep.mubr.f32.mxu0 0.0
      %289 = vmatmul.mubr.f32.gmra.mxu0 %v218
      %v290 = vpop.f32.mrf.mxu0
      %v291 = vadd.f32 0.0, %v290
      %v292 = vpop.f32.mrf.mxu0
      %293 = vdwg.mxu0
      %v294 = vpack.c.bf16 %v291, %v291
      %vm295 = vcmask 516096
      %296 = vst.msk [vmem:[#allocation4] sm:$0x1] %vm295, %v294
      %vm297 = vcmask 64512
      %298 = vst.msk [vmem:[#allocation5] sm:$0xff] %vm297, 0.0
      %vm299 = vcmask 58368
      %300 = vst.msk [vmem:[#allocation6] sm:$0x3] %vm299, 0.0
    $region53: #{graphnet_forward.1} parent=1 // pred_fallthru
      _
    %v301 = vld [vmem:[%s1] sm:$0xff]
    %v302 = vld [vmem:[%s1 + $0x8] sm:$0xff]
    %v303 = vlaneseq
    %v304 = vand.u32 %v303, 127
    %305 = vset.pattern.permute.xlu0 0
    %306 = vperm.xlu0 %305, %v301
    %v307 = vpop.permute.xlu0 %306
    %308 = vset.pattern.permute.xlu0 0
    %309 = vperm.xlu0 %308, %v302
    %v310 = vpop.permute.xlu0 %309
    %vm311 = vcmp.eq.s32.totalorder %v307, %v304
    %vm312 = vcmp.eq.s32.totalorder %v310, %v304
    %v313 = vsel %vm311, 1, 0
    %v314 = vsel %vm312, 1, 0
    %v315 = vcvt.s32.f32 %v313
    %v316 = vcvt.s32.f32 %v314
    %v317 = vpack.c.bf16 %v316, %v315
    %318 = vset.pattern.permute.xlu0 1
    %319 = vperm.xlu0 %318, %v301
    %v320 = vpop.permute.xlu0 %319
    %321 = vset.pattern.permute.xlu0 1
    %322 = vperm.xlu0 %321, %v302
    %v323 = vpop.permute.xlu0 %322
    %vm324 = vcmp.eq.s32.totalorder %v320, %v304
    %vm325 = vcmp.eq.s32.totalorder %v323, %v304
    %v326 = vsel %vm324, 1, 0
    %v327 = vsel %vm325, 1, 0
    %v328 = vcvt.s32.f32 %v326
    %v329 = vcvt.s32.f32 %v327
    %v330 = vpack.c.bf16 %v329, %v328
    %331 = vset.pattern.permute.xlu0 2
    %332 = vperm.xlu0 %331, %v301
    %v333 = vpop.permute.xlu0 %332
    %334 = vset.pattern.permute.xlu0 2
    %335 = vperm.xlu0 %334, %v302
    %v336 = vpop.permute.xlu0 %335
    %vm337 = vcmp.eq.s32.totalorder %v333, %v304
    %vm338 = vcmp.eq.s32.totalorder %v336, %v304
    %v339 = vsel %vm337, 1, 0
    %v340 = vsel %vm338, 1, 0
    %v341 = vcvt.s32.f32 %v339
    %v342 = vcvt.s32.f32 %v340
    %v343 = vpack.c.bf16 %v342, %v341
    %v344 = vld [vmem:[%s6 + $0x8] sm:$0x3]
    %v345 = vld [vmem:[%s6 + $0xd] sm:$0x1]
    %v346 = vld [vmem:[%s0] sm:$0xff]
    %v347 = vld [vmem:[%s0 + $0x8] sm:$0xff]
    %349 = vset.pattern.permute.xlu0 0
    %350 = vperm.xlu0 %349, %v346
    %v351 = vpop.permute.xlu0 %350
    %354 = vset.pattern.permute.xlu0 0
    %355 = vperm.xlu0 %354, %v347
    %v356 = vpop.permute.xlu0 %355
    %v358 = vlaneseq
    %v359 = vshrl.u32 %v358, 7
    %v360 = vsub.s32 0, %v359
    %v361 = vrot.slane %v344, %v360
    %v362 = vmul.f32 %v351, %v361
    %v363 = vmul.f32 %v356, %v361
    %364 = vset.pattern.permute.xlu0 1
    %365 = vperm.xlu0 %364, %v346
    %v366 = vpop.permute.xlu0 %365
    %368 = vset.pattern.permute.xlu0 1
    %369 = vperm.xlu0 %368, %v347
    %v370 = vpop.permute.xlu0 %369
    %v372 = vlaneseq
    %v373 = vshrl.u32 %v372, 7
    %v374 = vsub.s32 1, %v373
    %v375 = vrot.slane %v344, %v374
    %v376 = vmul.f32 %v366, %v375
    %v377 = vmul.f32 %v370, %v375
    %v378 = vadd.f32 %v362, %v376
    %v379 = vadd.f32 %v363, %v377
    %v380 = vld [vmem:[#allocation2] sm:$0xf]
    %v381 = vld [vmem:[#allocation3] sm:$0xf]
    %vm382 = vcmask 64512
    %v384 = vsel %vm382, %v330, 0
    %vm386 = vcmask 1043456
    %v388 = vsel %vm386, %v381, 0
    %390 = vmatprep.subr.bf16.mxu0 0
    %391 = vmatpush1.bf16.msra.mxu0 0
    %392 = vmatprep.subr.bf16.mxu0 0
    %393 = vmatpush1.bf16.msra.mxu0 0
    %394 = vmatprep.subr.bf16.mxu0 0
    %395 = vmatpush1.bf16.msra.mxu0 0
    %396 = vmatprep.subr.bf16.mxu0 0
    %397 = vmatpush1.bf16.msra.mxu0 0
    %398 = vmatprep.subr.bf16.mxu0 0
    %399 = vmatpush1.bf16.msra.mxu0 0
    %400 = vmatprep.subr.bf16.mxu0 0
    %401 = vmatpush1.bf16.msra.mxu0 0
    %402 = vmatprep.subr.bf16.mxu0 0
    %403 = vmatpush1.bf16.msra.mxu0 0
    %404 = vmatprep.subr.bf16.mxu0 0
    %405 = vmatpush1.bf16.msra.mxu0 %v388
    %406 = vmatprep.subr.bf16.mxu0 0
    %407 = vmatpush2.bf16.msra.mxu0 0
    %408 = vmatprep.subr.bf16.mxu0 0
    %409 = vmatpush2.bf16.msra.mxu0 0
    %410 = vmatprep.subr.bf16.mxu0 0
    %411 = vmatpush2.bf16.msra.mxu0 0
    %412 = vmatprep.subr.bf16.mxu0 0
    %413 = vmatpush2.bf16.msra.mxu0 0
    %414 = vmatprep.subr.bf16.mxu0 0
    %415 = vmatpush2.bf16.msra.mxu0 0
    %416 = vmatprep.subr.bf16.mxu0 0
    %417 = vmatpush2.bf16.msra.mxu0 0
    %418 = vmatprep.subr.bf16.mxu0 0
    %419 = vmatpush2.bf16.msra.mxu0 0
    %420 = vmatprep.subr.bf16.mxu0 0
    %421 = vmatpush2.bf16.msra.mxu0 0
    %422 = vmatprep.mubr.bf16.mxu0 0
    %423 = vmatmul.mubr.bf16.gmra.mxu0 %v384
    %v424 = vpop.f32.mrf.mxu0
    %v425 = vadd.f32 0.0, %v424
    %v426 = vpop.f32.mrf.mxu0
    %v427 = vpop.f32.mrf.mxu0
    %v428 = vadd.f32 0.0, %v427
    %v429 = vpop.f32.mrf.mxu0
    %430 = vdwg.mxu0
    %v432 = vsel %vm382, %v317, 0
    %v435 = vsel %vm386, %v380, 0
    %437 = vmatprep.subr.bf16.mxu0 0
    %438 = vmatpush1.bf16.msra.mxu0 0
    %439 = vmatprep.subr.bf16.mxu0 0
    %440 = vmatpush1.bf16.msra.mxu0 0
    %441 = vmatprep.subr.bf16.mxu0 0
    %442 = vmatpush1.bf16.msra.mxu0 0
    %443 = vmatprep.subr.bf16.mxu0 0
    %444 = vmatpush1.bf16.msra.mxu0 0
    %445 = vmatprep.subr.bf16.mxu0 0
    %446 = vmatpush1.bf16.msra.mxu0 0
    %447 = vmatprep.subr.bf16.mxu0 0
    %448 = vmatpush1.bf16.msra.mxu0 0
    %449 = vmatprep.subr.bf16.mxu0 0
    %450 = vmatpush1.bf16.msra.mxu0 0
    %451 = vmatprep.subr.bf16.mxu0 0
    %452 = vmatpush1.bf16.msra.mxu0 %v435
    %453 = vmatprep.subr.bf16.mxu0 0
    %454 = vmatpush2.bf16.msra.mxu0 0
    %455 = vmatprep.subr.bf16.mxu0 0
    %456 = vmatpush2.bf16.msra.mxu0 0
    %457 = vmatprep.subr.bf16.mxu0 0
    %458 = vmatpush2.bf16.msra.mxu0 0
    %459 = vmatprep.subr.bf16.mxu0 0
    %460 = vmatpush2.bf16.msra.mxu0 0
    %461 = vmatprep.subr.bf16.mxu0 0
    %462 = vmatpush2.bf16.msra.mxu0 0
    %463 = vmatprep.subr.bf16.mxu0 0
    %464 = vmatpush2.bf16.msra.mxu0 0
    %465 = vmatprep.subr.bf16.mxu0 0
    %466 = vmatpush2.bf16.msra.mxu0 0
    %467 = vmatprep.subr.bf16.mxu0 0
    %468 = vmatpush2.bf16.msra.mxu0 0
    %469 = vmatprep.mubr.bf16.mxu0 0
    %470 = vmatmul.mubr.bf16.gmra.mxu0 %v432
    %v471 = vpop.f32.mrf.mxu0
    %v472 = vadd.f32 %v425, %v471
    %v473 = vpop.f32.mrf.mxu0
    %v474 = vpop.f32.mrf.mxu0
    %v475 = vadd.f32 %v428, %v474
    %v476 = vpop.f32.mrf.mxu0
    %477 = vdwg.mxu0
    %v478 = vld [vmem:[#allocation4] sm:$0x1]
    %vm479 = vcmask 15360
    %v481 = vsel %vm479, %v343, 0
    %vm483 = vcmask 1040384
    %v485 = vsel %vm483, %v478, 0
    %487 = vmatprep.subr.bf16.mxu0 0
    %488 = vmatpush1.bf16.msra.mxu0 0
    %489 = vmatprep.subr.bf16.mxu0 0
    %490 = vmatpush1.bf16.msra.mxu0 0
    %491 = vmatprep.subr.bf16.mxu0 0
    %492 = vmatpush1.bf16.msra.mxu0 0
    %493 = vmatprep.subr.bf16.mxu0 0
    %494 = vmatpush1.bf16.msra.mxu0 0
    %495 = vmatprep.subr.bf16.mxu0 0
    %496 = vmatpush1.bf16.msra.mxu0 0
    %497 = vmatprep.subr.bf16.mxu0 0
    %498 = vmatpush1.bf16.msra.mxu0 0
    %499 = vmatprep.subr.bf16.mxu0 0
    %500 = vmatpush1.bf16.msra.mxu0 0
    %501 = vmatprep.subr.bf16.mxu0 0
    %502 = vmatpush1.bf16.msra.mxu0 %v485
    %503 = vmatprep.subr.bf16.mxu0 0
    %504 = vmatpush2.bf16.msra.mxu0 0
    %505 = vmatprep.subr.bf16.mxu0 0
    %506 = vmatpush2.bf16.msra.mxu0 0
    %507 = vmatprep.subr.bf16.mxu0 0
    %508 = vmatpush2.bf16.msra.mxu0 0
    %509 = vmatprep.subr.bf16.mxu0 0
    %510 = vmatpush2.bf16.msra.mxu0 0
    %511 = vmatprep.subr.bf16.mxu0 0
    %512 = vmatpush2.bf16.msra.mxu0 0
    %513 = vmatprep.subr.bf16.mxu0 0
    %514 = vmatpush2.bf16.msra.mxu0 0
    %515 = vmatprep.subr.bf16.mxu0 0
    %516 = vmatpush2.bf16.msra.mxu0 0
    %517 = vmatprep.subr.bf16.mxu0 0
    %518 = vmatpush2.bf16.msra.mxu0 0
    %519 = vmatprep.mubr.bf16.mxu0 0
    %520 = vmatmul.mubr.bf16.gmra.mxu0 %v481
    %v521 = vpop.f32.mrf.mxu0
    %v522 = vadd.f32 0.0, %v521
    %v523 = vpop.f32.mrf.mxu0
    %v524 = vpop.f32.mrf.mxu0
    %v525 = vadd.f32 0.0, %v524
    %v526 = vpop.f32.mrf.mxu0
    %527 = vdwg.mxu0
    %v528 = vadd.f32 %v472, %v522
    %v529 = vadd.f32 %v475, %v525
    %v530 = vadd.f32 %v528, %v378
    %v531 = vadd.f32 %v529, %v379
    %v532 = vlaneseq
    %v533 = vshrl.u32 %v532, 7
    %v534 = vsub.s32 0, %v533
    %v535 = vrot.slane %v345, %v534
    %v536 = vadd.f32 %v530, %v535
    %v537 = vadd.f32 %v531, %v535
    %v538 = vmax.f32 %v536, 0.0
    %v539 = vmax.f32 %v537, 0.0
    %v540 = vld [vmem:[%s7] sm:$0xff]
    %v541 = vld [vmem:[%s7 + $0x8] sm:$0xff]
    %v542 = vld [vmem:[%s7 + $0x10] sm:$0xff]
    %v543 = vld [vmem:[%s7 + $0x18] sm:$0xff]
    %v544 = vld [vmem:[%s7 + $0x20] sm:$0xff]
    %v545 = vld [vmem:[%s7 + $0x28] sm:$0xff]
    %v546 = vld [vmem:[%s7 + $0x30] sm:$0xff]
    %v547 = vld [vmem:[%s7 + $0x38] sm:$0xff]
    %v548 = vld [vmem:[%s7 + $0x40] sm:$0x1]
    %v549 = vld [vmem:[%s7 + $0x41] sm:$0x1]
    %v550 = vld [vmem:[%s7 + $0x42] sm:$0x1]
    %v551 = vlaneseq
    %v552 = vshrl.u32 %v551, 7
    %v553 = vsub.s32 0, %v552
    %v554 = vrot.slane %v548, %v553
    %vm555 = vcmask 523264
    %v557 = vsel %vm555, %v538, 0
    %v560 = vsel %vm555, %v539, 0
    %562 = vmatprep.subr.mxu0 0.0
    %563 = vmatpush1.msra.mxu0 0.0
    %564 = vmatprep.subr.mxu0 0.0
    %565 = vmatpush1.msra.mxu0 0.0
    %566 = vmatprep.subr.mxu0 0.0
    %567 = vmatpush1.msra.mxu0 0.0
    %568 = vmatprep.subr.mxu0 0.0
    %569 = vmatpush1.msra.mxu0 0.0
    %570 = vmatprep.subr.mxu0 0.0
    %571 = vmatpush1.msra.mxu0 0.0
    %572 = vmatprep.subr.mxu0 0.0
    %573 = vmatpush1.msra.mxu0 0.0
    %574 = vmatprep.subr.mxu0 0.0
    %575 = vmatpush1.msra.mxu0 0.0
    %576 = vmatprep.subr.mxu0 0.0
    %577 = vmatpush1.msra.mxu0 0.0
    %578 = vmatprep.subr.mxu0 0.0
    %579 = vmatpush1.msra.mxu0 %v547
    %580 = vmatprep.subr.mxu0 0.0
    %581 = vmatpush1.msra.mxu0 %v546
    %582 = vmatprep.subr.mxu0 0.0
    %583 = vmatpush1.msra.mxu0 %v545
    %584 = vmatprep.subr.mxu0 0.0
    %585 = vmatpush1.msra.mxu0 %v544
    %586 = vmatprep.subr.mxu0 0.0
    %587 = vmatpush1.msra.mxu0 %v543
    %588 = vmatprep.subr.mxu0 0.0
    %589 = vmatpush1.msra.mxu0 %v542
    %590 = vmatprep.subr.mxu0 0.0
    %591 = vmatpush1.msra.mxu0 %v541
    %592 = vmatprep.subr.mxu0 0.0
    %593 = vmatpush1.msra.mxu0 %v540
    %594 = vmatprep.subr.mxu0 0.0
    %595 = vmatpush2.msra.mxu0 0.0
    %596 = vmatprep.subr.mxu0 0.0
    %597 = vmatpush2.msra.mxu0 0.0
    %598 = vmatprep.subr.mxu0 0.0
    %599 = vmatpush2.msra.mxu0 0.0
    %600 = vmatprep.subr.mxu0 0.0
    %601 = vmatpush2.msra.mxu0 0.0
    %602 = vmatprep.subr.mxu0 0.0
    %603 = vmatpush2.msra.mxu0 0.0
    %604 = vmatprep.subr.mxu0 0.0
    %605 = vmatpush2.msra.mxu0 0.0
    %606 = vmatprep.subr.mxu0 0.0
    %607 = vmatpush2.msra.mxu0 0.0
    %608 = vmatprep.subr.mxu0 0.0
    %609 = vmatpush2.msra.mxu0 0.0
    %610 = vmatprep.subr.mxu0 0.0
    %611 = vmatpush2.msra.mxu0 0.0
    %612 = vmatprep.subr.mxu0 0.0
    %613 = vmatpush2.msra.mxu0 0.0
    %614 = vmatprep.subr.mxu0 0.0
    %615 = vmatpush2.msra.mxu0 0.0
    %616 = vmatprep.subr.mxu0 0.0
    %617 = vmatpush2.msra.mxu0 0.0
    %618 = vmatprep.subr.mxu0 0.0
    %619 = vmatpush2.msra.mxu0 0.0
    %620 = vmatprep.subr.mxu0 0.0
    %621 = vmatpush2.msra.mxu0 0.0
    %622 = vmatprep.subr.mxu0 0.0
    %623 = vmatpush2.msra.mxu0 0.0
    %624 = vmatprep.subr.mxu0 0.0
    %625 = vmatpush2.msra.mxu0 0.0
    %626 = vmatprep.mubr.f32.mxu0 0.0
    %627 = vmatmul.mubr.f32.gmra.mxu0 %v557
    %v628 = vpop.f32.mrf.mxu0
    %v629 = vadd.f32 %v554, %v628
    %v630 = vpop.f32.mrf.mxu0
    %631 = vmatprep.mubr.f32.mxu0 0.0
    %632 = vmatmul.mubr.f32.gmra.mxu0 %v560
    %v633 = vpop.f32.mrf.mxu0
    %v634 = vadd.f32 %v554, %v633
    %v635 = vpop.f32.mrf.mxu0
    %636 = vdwg.mxu0
    %v637 = vmax.f32 %v629, 0.0
    %v638 = vmax.f32 %v634, 0.0
    %v639 = vsel %vm382, %v637, 0.0
    %640 = vadd.xlane.f32.xlu0 %v639
    %v641 = vpop.xlane.xlu0 %640
    %v642 = vsel %vm382, %v638, 0.0
    %643 = vadd.xlane.f32.xlu0 %v642
    %v644 = vpop.xlane.xlu0 %643
    %v645 = vrcp.pop 8.0
    %v646 = vmul.f32 %v641, %v645
    %v647 = vmul.f32 %v644, %v645
    %v648 = vsub.f32 %v637, %v646
    %v649 = vsub.f32 %v638, %v647
    %v650 = vmul.f32 %v648, %v648
    %v651 = vmul.f32 %v649, %v649
    %v652 = vsel %vm382, %v650, 0.0
    %653 = vadd.xlane.f32.xlu0 %v652
    %v654 = vpop.xlane.xlu0 %653
    %v655 = vsel %vm382, %v651, 0.0
    %656 = vadd.xlane.f32.xlu0 %v655
    %v657 = vpop.xlane.xlu0 %656
    %v658 = vmul.f32 %v654, %v645
    %v659 = vmul.f32 %v657, %v645
    %v660 = vadd.f32 %v658, 1e-05
    %v661 = vadd.f32 %v659, 1e-05
    %v662 = vrsqrt.pop %v660
    %v663 = vrsqrt.pop %v661
    %v664 = vmul.f32 %v648, %v662
    %v665 = vmul.f32 %v649, %v663
    %v666 = vlaneseq
    %v667 = vshrl.u32 %v666, 7
    %v668 = vsub.s32 0, %v667
    %v669 = vrot.slane %v549, %v668
    %v670 = vmul.f32 %v664, %v669
    %v671 = vmul.f32 %v665, %v669
    %v672 = vlaneseq
    %v673 = vshrl.u32 %v672, 7
    %v674 = vsub.s32 0, %v673
    %v675 = vrot.slane %v550, %v674
    %v676 = vadd.f32 %v670, %v675
    %v677 = vadd.f32 %v671, %v675
    %678 = vst.msk [vmem:[%s12] sm:$0xff] %vm382, %v676
    %679 = vst.msk [vmem:[%s12 + $0x8] sm:$0xff] %vm382, %v677
    %v680 = vld [vmem:[#allocation5] sm:$0xff]
    %681 = vxpose.xlu0.b32.start [1/16] %v315, 128
    %682 = vxpose.xlu0.b32.cont [2/16] %v316, 128
    %683 = vxpose.xlu0.b32.cont [3/16] 0.0, 128
    %684 = vxpose.xlu0.b32.cont [4/16] 0.0, 128
    %685 = vxpose.xlu0.b32.cont [5/16] 0.0, 128
    %686 = vxpose.xlu0.b32.cont [6/16] 0.0, 128
    %687 = vxpose.xlu0.b32.cont [7/16] 0.0, 128
    %688 = vxpose.xlu0.b32.cont [8/16] 0.0, 128
    %689 = vxpose.xlu0.b32.cont [9/16] 0.0, 128
    %690 = vxpose.xlu0.b32.cont [10/16] 0.0, 128
    %691 = vxpose.xlu0.b32.cont [11/16] 0.0, 128
    %692 = vxpose.xlu0.b32.cont [12/16] 0.0, 128
    %693 = vxpose.xlu0.b32.cont [13/16] 0.0, 128
    %694 = vxpose.xlu0.b32.cont [14/16] 0.0, 128
    %695 = vxpose.xlu0.b32.cont [15/16] 0.0, 128
    %696 = vxpose.xlu0.b32.end [16/16] 0.0, 128
    %v697 = vpop.trf.xlu0
    %v698 = vpop.trf.xlu0
    %v699 = vpop.trf.xlu0
    %v700 = vpop.trf.xlu0
    %v701 = vpop.trf.xlu0
    %v702 = vpop.trf.xlu0
    %v703 = vpop.trf.xlu0
    %v704 = vpop.trf.xlu0
    %v705 = vpop.trf.xlu0
    %v706 = vpop.trf.xlu0
    %v707 = vpop.trf.xlu0
    %v708 = vpop.trf.xlu0
    %v709 = vpop.trf.xlu0
    %v710 = vpop.trf.xlu0
    %v711 = vpop.trf.xlu0
    %v712 = vpop.trf.xlu0
    %vm713 = vcmask 130048
    %v715 = vsel %vm713, %v697, 0
    %717 = vmatprep.subr.mxu0 0.0
    %718 = vmatpush1.msra.mxu0 0.0
    %719 = vmatprep.subr.mxu0 0.0
    %720 = vmatpush1.msra.mxu0 0.0
    %721 = vmatprep.subr.mxu0 0.0
    %722 = vmatpush1.msra.mxu0 0.0
    %723 = vmatprep.subr.mxu0 0.0
    %724 = vmatpush1.msra.mxu0 0.0
    %725 = vmatprep.subr.mxu0 0.0
    %726 = vmatpush1.msra.mxu0 0.0
    %727 = vmatprep.subr.mxu0 0.0
    %728 = vmatpush1.msra.mxu0 0.0
    %729 = vmatprep.subr.mxu0 0.0
    %730 = vmatpush1.msra.mxu0 0.0
    %731 = vmatprep.subr.mxu0 0.0
    %732 = vmatpush1.msra.mxu0 0.0
    %733 = vmatprep.subr.mxu0 0.0
    %734 = vmatpush1.msra.mxu0 0.0
    %735 = vmatprep.subr.mxu0 0.0
    %736 = vmatpush1.msra.mxu0 0.0
    %737 = vmatprep.subr.mxu0 0.0
    %738 = vmatpush1.msra.mxu0 0.0
    %739 = vmatprep.subr.mxu0 0.0
    %740 = vmatpush1.msra.mxu0 0.0
    %741 = vmatprep.subr.mxu0 0.0
    %742 = vmatpush1.msra.mxu0 0.0
    %743 = vmatprep.subr.mxu0 0.0
    %744 = vmatpush1.msra.mxu0 0.0
    %745 = vmatprep.subr.mxu0 0.0
    %746 = vmatpush1.msra.mxu0 %v677
    %747 = vmatprep.subr.mxu0 0.0
    %748 = vmatpush1.msra.mxu0 %v676
    %749 = vmatprep.subr.mxu0 0.0
    %750 = vmatpush2.msra.mxu0 0.0
    %751 = vmatprep.subr.mxu0 0.0
    %752 = vmatpush2.msra.mxu0 0.0
    %753 = vmatprep.subr.mxu0 0.0
    %754 = vmatpush2.msra.mxu0 0.0
    %755 = vmatprep.subr.mxu0 0.0
    %756 = vmatpush2.msra.mxu0 0.0
    %757 = vmatprep.subr.mxu0 0.0
    %758 = vmatpush2.msra.mxu0 0.0
    %759 = vmatprep.subr.mxu0 0.0
    %760 = vmatpush2.msra.mxu0 0.0
    %761 = vmatprep.subr.mxu0 0.0
    %762 = vmatpush2.msra.mxu0 0.0
    %763 = vmatprep.subr.mxu0 0.0
    %764 = vmatpush2.msra.mxu0 0.0
    %765 = vmatprep.subr.mxu0 0.0
    %766 = vmatpush2.msra.mxu0 0.0
    %767 = vmatprep.subr.mxu0 0.0
    %768 = vmatpush2.msra.mxu0 0.0
    %769 = vmatprep.subr.mxu0 0.0
    %770 = vmatpush2.msra.mxu0 0.0
    %771 = vmatprep.subr.mxu0 0.0
    %772 = vmatpush2.msra.mxu0 0.0
    %773 = vmatprep.subr.mxu0 0.0
    %774 = vmatpush2.msra.mxu0 0.0
    %775 = vmatprep.subr.mxu0 0.0
    %776 = vmatpush2.msra.mxu0 0.0
    %777 = vmatprep.subr.mxu0 0.0
    %778 = vmatpush2.msra.mxu0 0.0
    %779 = vmatprep.subr.mxu0 0.0
    %780 = vmatpush2.msra.mxu0 0.0
    %781 = vmatprep.mubr.f32.mxu0 0.0
    %782 = vmatmul.mubr.f32.gmra.mxu0 %v715
    %v783 = vpop.f32.mrf.mxu0
    %v784 = vadd.f32 0.0, %v783
    %v785 = vpop.f32.mrf.mxu0
    %786 = vdwg.mxu0
    %v787 = vadd.f32 %v680, %v784
    %788 = vst.msk [vmem:[#allocation5] sm:$0xff] %vm382, %v787
    %v789 = vld [vmem:[#allocation6] sm:$0x3]
    %790 = vxpose.xlu0.b32.start [1/16] %v341, 128
    %791 = vxpose.xlu0.b32.cont [2/16] %v342, 128
    %792 = vxpose.xlu0.b32.cont [3/16] 0.0, 128
    %793 = vxpose.xlu0.b32.cont [4/16] 0.0, 128
    %794 = vxpose.xlu0.b32.cont [5/16] 0.0, 128
    %795 = vxpose.xlu0.b32.cont [6/16] 0.0, 128
    %796 = vxpose.xlu0.b32.cont [7/16] 0.0, 128
    %797 = vxpose.xlu0.b32.cont [8/16] 0.0, 128
    %798 = vxpose.xlu0.b32.cont [9/16] 0.0, 128
    %799 = vxpose.xlu0.b32.cont [10/16] 0.0, 128
    %800 = vxpose.xlu0.b32.cont [11/16] 0.0, 128
    %801 = vxpose.xlu0.b32.cont [12/16] 0.0, 128
    %802 = vxpose.xlu0.b32.cont [13/16] 0.0, 128
    %803 = vxpose.xlu0.b32.cont [14/16] 0.0, 128
    %804 = vxpose.xlu0.b32.cont [15/16] 0.0, 128
    %805 = vxpose.xlu0.b32.end [16/16] 0.0, 128
    %v806 = vpop.trf.xlu0
    %v807 = vpop.trf.xlu0
    %v808 = vpop.trf.xlu0
    %v809 = vpop.trf.xlu0
    %v810 = vpop.trf.xlu0
    %v811 = vpop.trf.xlu0
    %v812 = vpop.trf.xlu0
    %v813 = vpop.trf.xlu0
    %v814 = vpop.trf.xlu0
    %v815 = vpop.trf.xlu0
    %v816 = vpop.trf.xlu0
    %v817 = vpop.trf.xlu0
    %v818 = vpop.trf.xlu0
    %v819 = vpop.trf.xlu0
    %v820 = vpop.trf.xlu0
    %v821 = vpop.trf.xlu0
    %v823 = vsel %vm713, %v806, 0
    %825 = vmatprep.subr.mxu0 0.0
    %826 = vmatpush1.msra.mxu0 0.0
    %827 = vmatprep.subr.mxu0 0.0
    %828 = vmatpush1.msra.mxu0 0.0
    %829 = vmatprep.subr.mxu0 0.0
    %830 = vmatpush1.msra.mxu0 0.0
    %831 = vmatprep.subr.mxu0 0.0
    %832 = vmatpush1.msra.mxu0 0.0
    %833 = vmatprep.subr.mxu0 0.0
    %834 = vmatpush1.msra.mxu0 0.0
    %835 = vmatprep.subr.mxu0 0.0
    %836 = vmatpush1.msra.mxu0 0.0
    %837 = vmatprep.subr.mxu0 0.0
    %838 = vmatpush1.msra.mxu0 0.0
    %839 = vmatprep.subr.mxu0 0.0
    %840 = vmatpush1.msra.mxu0 0.0
    %841 = vmatprep.subr.mxu0 0.0
    %842 = vmatpush1.msra.mxu0 0.0
    %843 = vmatprep.subr.mxu0 0.0
    %844 = vmatpush1.msra.mxu0 0.0
    %845 = vmatprep.subr.mxu0 0.0
    %846 = vmatpush1.msra.mxu0 0.0
    %847 = vmatprep.subr.mxu0 0.0
    %848 = vmatpush1.msra.mxu0 0.0
    %849 = vmatprep.subr.mxu0 0.0
    %850 = vmatpush1.msra.mxu0 0.0
    %851 = vmatprep.subr.mxu0 0.0
    %852 = vmatpush1.msra.mxu0 0.0
    %853 = vmatprep.subr.mxu0 0.0
    %854 = vmatpush1.msra.mxu0 %v677
    %855 = vmatprep.subr.mxu0 0.0
    %856 = vmatpush1.msra.mxu0 %v676
    %857 = vmatprep.subr.mxu0 0.0
    %858 = vmatpush2.msra.mxu0 0.0
    %859 = vmatprep.subr.mxu0 0.0
    %860 = vmatpush2.msra.mxu0 0.0
    %861 = vmatprep.subr.mxu0 0.0
    %862 = vmatpush2.msra.mxu0 0.0
    %863 = vmatprep.subr.mxu0 0.0
    %864 = vmatpush2.msra.mxu0 0.0
    %865 = vmatprep.subr.mxu0 0.0
    %866 = vmatpush2.msra.mxu0 0.0
    %867 = vmatprep.subr.mxu0 0.0
    %868 = vmatpush2.msra.mxu0 0.0
    %869 = vmatprep.subr.mxu0 0.0
    %870 = vmatpush2.msra.mxu0 0.0
    %871 = vmatprep.subr.mxu0 0.0
    %872 = vmatpush2.msra.mxu0 0.0
    %873 = vmatprep.subr.mxu0 0.0
    %874 = vmatpush2.msra.mxu0 0.0
    %875 = vmatprep.subr.mxu0 0.0
    %876 = vmatpush2.msra.mxu0 0.0
    %877 = vmatprep.subr.mxu0 0.0
    %878 = vmatpush2.msra.mxu0 0.0
    %879 = vmatprep.subr.mxu0 0.0
    %880 = vmatpush2.msra.mxu0 0.0
    %881 = vmatprep.subr.mxu0 0.0
    %882 = vmatpush2.msra.mxu0 0.0
    %883 = vmatprep.subr.mxu0 0.0
    %884 = vmatpush2.msra.mxu0 0.0
    %885 = vmatprep.subr.mxu0 0.0
    %886 = vmatpush2.msra.mxu0 0.0
    %887 = vmatprep.subr.mxu0 0.0
    %888 = vmatpush2.msra.mxu0 0.0
    %889 = vmatprep.mubr.f32.mxu0 0.0
    %890 = vmatmul.mubr.f32.gmra.mxu0 %v823
    %v891 = vpop.f32.mrf.mxu0
    %v892 = vadd.f32 0.0, %v891
    %v893 = vpop.f32.mrf.mxu0
    %894 = vdwg.mxu0
    %v895 = vadd.f32 %v789, %v892
    %vm896 = vcmask 58368
    %897 = vst.msk [vmem:[#allocation6] sm:$0x3] %vm896, %v895
    // Predicated region
    $region54: #{graphnet_forward.1} parent=1 // pred_check
      %p898 = pneg %p47
    $region55: #{graphnet_forward.1} parent=1 // pred_check_branch
      %900 = sbr.rel (%p898) target = $region57
    $region56: #{graphnet_forward.1} parent=1 // pred_region
      %v901 = vld [vmem:[%s4] sm:$0xff]
      %902 = vset.pattern.permute.xlu0 0
      %903 = vperm.xlu0 %902, %v901
      %v904 = vpop.permute.xlu0 %903
      %vm905 = vcmp.eq.s32.totalorder %v904, %v304
      %v906 = vsel %vm905, 1, 0
      %v907 = vcvt.s32.f32 %v906
      %v908 = vld [vmem:[%s8] sm:$0xf]
      %v909 = vld [vmem:[%s8 + $0x4] sm:$0xff]
      %v910 = vld [vmem:[%s8 + $0xc] sm:$0x7]
      %v911 = vld [vmem:[%s8 + $0xf] sm:$0x1]
      %v912 = vld [vmem:[%s3] sm:$0x3]
      %v914 = vsel %vm479, %v907, 0
      %vm916 = vcmask 1041408
      %v918 = vsel %vm916, %v912, 0
      %920 = vmatprep.subr.mxu0 0.0
      %921 = vmatpush1.msra.mxu0 0.0
      %922 = vmatprep.subr.mxu0 0.0
      %923 = vmatpush1.msra.mxu0 0.0
      %924 = vmatprep.subr.mxu0 0.0
      %925 = vmatpush1.msra.mxu0 0.0
      %926 = vmatprep.subr.mxu0 0.0
      %927 = vmatpush1.msra.mxu0 0.0
      %928 = vmatprep.subr.mxu0 0.0
      %929 = vmatpush1.msra.mxu0 0.0
      %930 = vmatprep.subr.mxu0 0.0
      %931 = vmatpush1.msra.mxu0 0.0
      %932 = vmatprep.subr.mxu0 0.0
      %933 = vmatpush1.msra.mxu0 0.0
      %934 = vmatprep.subr.mxu0 0.0
      %935 = vmatpush1.msra.mxu0 0.0
      %936 = vmatprep.subr.mxu0 0.0
      %937 = vmatpush1.msra.mxu0 0.0
      %938 = vmatprep.subr.mxu0 0.0
      %939 = vmatpush1.msra.mxu0 0.0
      %940 = vmatprep.subr.mxu0 0.0
      %941 = vmatpush1.msra.mxu0 0.0
      %942 = vmatprep.subr.mxu0 0.0
      %943 = vmatpush1.msra.mxu0 0.0
      %944 = vmatprep.subr.mxu0 0.0
      %945 = vmatpush1.msra.mxu0 0.0
      %946 = vmatprep.subr.mxu0 0.0
      %947 = vmatpush1.msra.mxu0 0.0
      %948 = vmatprep.subr.mxu0 0.0
      %949 = vmatpush1.msra.mxu0 0.0
      %950 = vmatprep.subr.mxu0 0.0
      %951 = vmatpush1.msra.mxu0 %v918
      %952 = vmatprep.subr.mxu0 0.0
      %953 = vmatpush2.msra.mxu0 0.0
      %954 = vmatprep.subr.mxu0 0.0
      %955 = vmatpush2.msra.mxu0 0.0
      %956 = vmatprep.subr.mxu0 0.0
      %957 = vmatpush2.msra.mxu0 0.0
      %958 = vmatprep.subr.mxu0 0.0
      %959 = vmatpush2.msra.mxu0 0.0
      %960 = vmatprep.subr.mxu0 0.0
      %961 = vmatpush2.msra.mxu0 0.0
      %962 = vmatprep.subr.mxu0 0.0
      %963 = vmatpush2.msra.mxu0 0.0
      %964 = vmatprep.subr.mxu0 0.0
      %965 = vmatpush2.msra.mxu0 0.0
      %966 = vmatprep.subr.mxu0 0.0
      %967 = vmatpush2.msra.mxu0 0.0
      %968 = vmatprep.subr.mxu0 0.0
      %969 = vmatpush2.msra.mxu0 0.0
      %970 = vmatprep.subr.mxu0 0.0
      %971 = vmatpush2.msra.mxu0 0.0
      %972 = vmatprep.subr.mxu0 0.0
      %973 = vmatpush2.msra.mxu0 0.0
      %974 = vmatprep.subr.mxu0 0.0
      %975 = vmatpush2.msra.mxu0 0.0
      %976 = vmatprep.subr.mxu0 0.0
      %977 = vmatpush2.msra.mxu0 0.0
      %978 = vmatprep.subr.mxu0 0.0
      %979 = vmatpush2.msra.mxu0 0.0
      %980 = vmatprep.subr.mxu0 0.0
      %981 = vmatpush2.msra.mxu0 0.0
      %982 = vmatprep.subr.mxu0 0.0
      %983 = vmatpush2.msra.mxu0 0.0
      %984 = vmatprep.mubr.f32.mxu0 0.0
      %985 = vmatmul.mubr.f32.gmra.mxu0 %v914
      %v986 = vpop.f32.mrf.mxu0
      %v987 = vadd.f32 0.0, %v986
      %v988 = vpop.f32.mrf.mxu0
      %989 = vdwg.mxu0
      %v990 = vld [vmem:[%s2] sm:$0xff]
      %v991 = vld [vmem:[#allocation5] sm:$0xff]
      %v993 = vsel %vm382, %v991, 0
      %995 = vmatprep.subr.mxu0 0.0
      %996 = vmatpush1.msra.mxu0 0.0
      %997 = vmatprep.subr.mxu0 0.0
      %998 = vmatpush1.msra.mxu0 0.0
      %999 = vmatprep.subr.mxu0 0.0
      %1000 = vmatpush1.msra.mxu0 0.0
      %1001 = vmatprep.subr.mxu0 0.0
      %1002 = vmatpush1.msra.mxu0 0.0
      %1003 = vmatprep.subr.mxu0 0.0
      %1004 = vmatpush1.msra.mxu0 0.0
      %1005 = vmatprep.subr.mxu0 0.0
      %1006 = vmatpush1.msra.mxu0 0.0
      %1007 = vmatprep.subr.mxu0 0.0
      %1008 = vmatpush1.msra.mxu0 0.0
      %1009 = vmatprep.subr.mxu0 0.0
      %1010 = vmatpush1.msra.mxu0 0.0
      %1011 = vmatprep.subr.mxu0 0.0
      %1012 = vmatpush1.msra.mxu0 0.0
      %1013 = vmatprep.subr.mxu0 0.0
      %1014 = vmatpush1.msra.mxu0 0.0
      %1015 = vmatprep.subr.mxu0 0.0
      %1016 = vmatpush1.msra.mxu0 0.0
      %1017 = vmatprep.subr.mxu0 0.0
      %1018 = vmatpush1.msra.mxu0 0.0
      %1019 = vmatprep.subr.mxu0 0.0
      %1020 = vmatpush1.msra.mxu0 0.0
      %1021 = vmatprep.subr.mxu0 0.0
      %1022 = vmatpush1.msra.mxu0 0.0
      %1023 = vmatprep.subr.mxu0 0.0
      %1024 = vmatpush1.msra.mxu0 0.0
      %1025 = vmatprep.subr.mxu0 0.0
      %1026 = vmatpush1.msra.mxu0 %v909
      %1027 = vmatprep.subr.mxu0 0.0
      %1028 = vmatpush2.msra.mxu0 0.0
      %1029 = vmatprep.subr.mxu0 0.0
      %1030 = vmatpush2.msra.mxu0 0.0
      %1031 = vmatprep.subr.mxu0 0.0
      %1032 = vmatpush2.msra.mxu0 0.0
      %1033 = vmatprep.subr.mxu0 0.0
      %1034 = vmatpush2.msra.mxu0 0.0
      %1035 = vmatprep.subr.mxu0 0.0
      %1036 = vmatpush2.msra.mxu0 0.0
      %1037 = vmatprep.subr.mxu0 0.0
      %1038 = vmatpush2.msra.mxu0 0.0
      %1039 = vmatprep.subr.mxu0 0.0
      %1040 = vmatpush2.msra.mxu0 0.0
      %1041 = vmatprep.subr.mxu0 0.0
      %1042 = vmatpush2.msra.mxu0 0.0
      %1043 = vmatprep.subr.mxu0 0.0
      %1044 = vmatpush2.msra.mxu0 0.0
      %1045 = vmatprep.subr.mxu0 0.0
      %1046 = vmatpush2.msra.mxu0 0.0
      %1047 = vmatprep.subr.mxu0 0.0
      %1048 = vmatpush2.msra.mxu0 0.0
      %1049 = vmatprep.subr.mxu0 0.0
      %1050 = vmatpush2.msra.mxu0 0.0
      %1051 = vmatprep.subr.mxu0 0.0
      %1052 = vmatpush2.msra.mxu0 0.0
      %1053 = vmatprep.subr.mxu0 0.0
      %1054 = vmatpush2.msra.mxu0 0.0
      %1055 = vmatprep.subr.mxu0 0.0
      %1056 = vmatpush2.msra.mxu0 0.0
      %1057 = vmatprep.subr.mxu0 0.0
      %1058 = vmatpush2.msra.mxu0 0.0
      %1059 = vmatprep.mubr.f32.mxu0 0.0
      %1060 = vmatmul.mubr.f32.gmra.mxu0 %v993
      %v1061 = vpop.f32.mrf.mxu0
      %v1062 = vadd.f32 0.0, %v1061
      %v1063 = vpop.f32.mrf.mxu0
      %1064 = vdwg.mxu0
      %vm1065 = vcmask 31744
      %v1067 = vsel %vm1065, %v990, 0
      %v1070 = vsel %vm386, %v908, 0
      %1072 = vmatprep.subr.mxu0 0.0
      %1073 = vmatpush1.msra.mxu0 0.0
      %1074 = vmatprep.subr.mxu0 0.0
      %1075 = vmatpush1.msra.mxu0 0.0
      %1076 = vmatprep.subr.mxu0 0.0
      %1077 = vmatpush1.msra.mxu0 0.0
      %1078 = vmatprep.subr.mxu0 0.0
      %1079 = vmatpush1.msra.mxu0 0.0
      %1080 = vmatprep.subr.mxu0 0.0
      %1081 = vmatpush1.msra.mxu0 0.0
      %1082 = vmatprep.subr.mxu0 0.0
      %1083 = vmatpush1.msra.mxu0 0.0
      %1084 = vmatprep.subr.mxu0 0.0
      %1085 = vmatpush1.msra.mxu0 0.0
      %1086 = vmatprep.subr.mxu0 0.0
      %1087 = vmatpush1.msra.mxu0 0.0
      %1088 = vmatprep.subr.mxu0 0.0
      %1089 = vmatpush1.msra.mxu0 0.0
      %1090 = vmatprep.subr.mxu0 0.0
      %1091 = vmatpush1.msra.mxu0 0.0
      %1092 = vmatprep.subr.mxu0 0.0
      %1093 = vmatpush1.msra.mxu0 0.0
      %1094 = vmatprep.subr.mxu0 0.0
      %1095 = vmatpush1.msra.mxu0 0.0
      %1096 = vmatprep.subr.mxu0 0.0
      %1097 = vmatpush1.msra.mxu0 0.0
      %1098 = vmatprep.subr.mxu0 0.0
      %1099 = vmatpush1.msra.mxu0 0.0
      %1100 = vmatprep.subr.mxu0 0.0
      %1101 = vmatpush1.msra.mxu0 0.0
      %1102 = vmatprep.subr.mxu0 0.0
      %1103 = vmatpush1.msra.mxu0 %v1070
      %1104 = vmatprep.subr.mxu0 0.0
      %1105 = vmatpush2.msra.mxu0 0.0
      %1106 = vmatprep.subr.mxu0 0.0
      %1107 = vmatpush2.msra.mxu0 0.0
      %1108 = vmatprep.subr.mxu0 0.0
      %1109 = vmatpush2.msra.mxu0 0.0
      %1110 = vmatprep.subr.mxu0 0.0
      %1111 = vmatpush2.msra.mxu0 0.0
      %1112 = vmatprep.subr.mxu0 0.0
      %1113 = vmatpush2.msra.mxu0 0.0
      %1114 = vmatprep.subr.mxu0 0.0
      %1115 = vmatpush2.msra.mxu0 0.0
      %1116 = vmatprep.subr.mxu0 0.0
      %1117 = vmatpush2.msra.mxu0 0.0
      %1118 = vmatprep.subr.mxu0 0.0
      %1119 = vmatpush2.msra.mxu0 0.0
      %1120 = vmatprep.subr.mxu0 0.0
      %1121 = vmatpush2.msra.mxu0 0.0
      %1122 = vmatprep.subr.mxu0 0.0
      %1123 = vmatpush2.msra.mxu0 0.0
      %1124 = vmatprep.subr.mxu0 0.0
      %1125 = vmatpush2.msra.mxu0 0.0
      %1126 = vmatprep.subr.mxu0 0.0
      %1127 = vmatpush2.msra.mxu0 0.0
      %1128 = vmatprep.subr.mxu0 0.0
      %1129 = vmatpush2.msra.mxu0 0.0
      %1130 = vmatprep.subr.mxu0 0.0
      %1131 = vmatpush2.msra.mxu0 0.0
      %1132 = vmatprep.subr.mxu0 0.0
      %1133 = vmatpush2.msra.mxu0 0.0
      %1134 = vmatprep.subr.mxu0 0.0
      %1135 = vmatpush2.msra.mxu0 0.0
      %1136 = vmatprep.mubr.f32.mxu0 0.0
      %1137 = vmatmul.mubr.f32.gmra.mxu0 %v1067
      %v1138 = vpop.f32.mrf.mxu0
      %v1139 = vadd.f32 %v1062, %v1138
      %v1140 = vpop.f32.mrf.mxu0
      %1141 = vdwg.mxu0
      %vm1142 = vcmask 23552
      %v1144 = vsel %vm1142, %v987, 0
      %vm1146 = vcmask 1042432
      %v1148 = vsel %vm1146, %v910, 0
      %1150 = vmatprep.subr.mxu0 0.0
      %1151 = vmatpush1.msra.mxu0 0.0
      %1152 = vmatprep.subr.mxu0 0.0
      %1153 = vmatpush1.msra.mxu0 0.0
      %1154 = vmatprep.subr.mxu0 0.0
      %1155 = vmatpush1.msra.mxu0 0.0
      %1156 = vmatprep.subr.mxu0 0.0
      %1157 = vmatpush1.msra.mxu0 0.0
      %1158 = vmatprep.subr.mxu0 0.0
      %1159 = vmatpush1.msra.mxu0 0.0
      %1160 = vmatprep.subr.mxu0 0.0
      %1161 = vmatpush1.msra.mxu0 0.0
      %1162 = vmatprep.subr.mxu0 0.0
      %1163 = vmatpush1.msra.mxu0 0.0
      %1164 = vmatprep.subr.mxu0 0.0
      %1165 = vmatpush1.msra.mxu0 0.0
      %1166 = vmatprep.subr.mxu0 0.0
      %1167 = vmatpush1.msra.mxu0 0.0
      %1168 = vmatprep.subr.mxu0 0.0
      %1169 = vmatpush1.msra.mxu0 0.0
      %1170 = vmatprep.subr.mxu0 0.0
      %1171 = vmatpush1.msra.mxu0 0.0
      %1172 = vmatprep.subr.mxu0 0.0
      %1173 = vmatpush1.msra.mxu0 0.0
      %1174 = vmatprep.subr.mxu0 0.0
      %1175 = vmatpush1.msra.mxu0 0.0
      %1176 = vmatprep.subr.mxu0 0.0
      %1177 = vmatpush1.msra.mxu0 0.0
      %1178 = vmatprep.subr.mxu0 0.0
      %1179 = vmatpush1.msra.mxu0 0.0
      %1180 = vmatprep.subr.mxu0 0.0
      %1181 = vmatpush1.msra.mxu0 %v1148
      %1182 = vmatprep.subr.mxu0 0.0
      %1183 = vmatpush2.msra.mxu0 0.0
      %1184 = vmatprep.subr.mxu0 0.0
      %1185 = vmatpush2.msra.mxu0 0.0
      %1186 = vmatprep.subr.mxu0 0.0
      %1187 = vmatpush2.msra.mxu0 0.0
      %1188 = vmatprep.subr.mxu0 0.0
      %1189 = vmatpush2.msra.mxu0 0.0
      %1190 = vmatprep.subr.mxu0 0.0
      %1191 = vmatpush2.msra.mxu0 0.0
      %1192 = vmatprep.subr.mxu0 0.0
      %1193 = vmatpush2.msra.mxu0 0.0
      %1194 = vmatprep.subr.mxu0 0.0
      %1195 = vmatpush2.msra.mxu0 0.0
      %1196 = vmatprep.subr.mxu0 0.0
      %1197 = vmatpush2.msra.mxu0 0.0
      %1198 = vmatprep.subr.mxu0 0.0
      %1199 = vmatpush2.msra.mxu0 0.0
      %1200 = vmatprep.subr.mxu0 0.0
      %1201 = vmatpush2.msra.mxu0 0.0
      %1202 = vmatprep.subr.mxu0 0.0
      %1203 = vmatpush2.msra.mxu0 0.0
      %1204 = vmatprep.subr.mxu0 0.0
      %1205 = vmatpush2.msra.mxu0 0.0
      %1206 = vmatprep.subr.mxu0 0.0
      %1207 = vmatpush2.msra.mxu0 0.0
      %1208 = vmatprep.subr.mxu0 0.0
      %1209 = vmatpush2.msra.mxu0 0.0
      %1210 = vmatprep.subr.mxu0 0.0
      %1211 = vmatpush2.msra.mxu0 0.0
      %1212 = vmatprep.subr.mxu0 0.0
      %1213 = vmatpush2.msra.mxu0 0.0
      %1214 = vmatprep.mubr.f32.mxu0 0.0
      %1215 = vmatmul.mubr.f32.gmra.mxu0 %v1144
      %v1216 = vpop.f32.mrf.mxu0
      %v1217 = vadd.f32 0.0, %v1216
      %v1218 = vpop.f32.mrf.mxu0
      %1219 = vdwg.mxu0
      %v1220 = vadd.f32 %v1139, %v1217
      %v1221 = vlaneseq
      %v1222 = vshrl.u32 %v1221, 7
      %v1223 = vsub.s32 0, %v1222
      %v1224 = vrot.slane %v911, %v1223
      %v1225 = vadd.f32 %v1220, %v1224
      %v1226 = vmax.f32 %v1225, 0.0
      %v1227 = vld [vmem:[%s9] sm:$0xff]
      %v1228 = vld [vmem:[%s9 + $0x8] sm:$0xff]
      %v1229 = vld [vmem:[%s9 + $0x10] sm:$0xff]
      %v1230 = vld [vmem:[%s9 + $0x18] sm:$0xff]
      %v1231 = vld [vmem:[%s9 + $0x20] sm:$0xff]
      %v1232 = vld [vmem:[%s9 + $0x28] sm:$0xff]
      %v1233 = vld [vmem:[%s9 + $0x30] sm:$0xff]
      %v1234 = vld [vmem:[%s9 + $0x38] sm:$0xff]
      %v1235 = vld [vmem:[%s9 + $0x40] sm:$0x1]
      %v1236 = vld [vmem:[%s9 + $0x41] sm:$0x1]
      %v1237 = vld [vmem:[%s9 + $0x42] sm:$0x1]
      %v1238 = vlaneseq
      %v1239 = vshrl.u32 %v1238, 7
      %v1240 = vsub.s32 0, %v1239
      %v1241 = vrot.slane %v1235, %v1240
      %v1243 = vsel %vm555, %v1226, 0
      %1245 = vmatprep.subr.mxu0 0.0
      %1246 = vmatpush1.msra.mxu0 0.0
      %1247 = vmatprep.subr.mxu0 0.0
      %1248 = vmatpush1.msra.mxu0 0.0
      %1249 = vmatprep.subr.mxu0 0.0
      %1250 = vmatpush1.msra.mxu0 0.0
      %1251 = vmatprep.subr.mxu0 0.0
      %1252 = vmatpush1.msra.mxu0 0.0
      %1253 = vmatprep.subr.mxu0 0.0
      %1254 = vmatpush1.msra.mxu0 0.0
      %1255 = vmatprep.subr.mxu0 0.0
      %1256 = vmatpush1.msra.mxu0 0.0
      %1257 = vmatprep.subr.mxu0 0.0
      %1258 = vmatpush1.msra.mxu0 0.0
      %1259 = vmatprep.subr.mxu0 0.0
      %1260 = vmatpush1.msra.mxu0 0.0
      %1261 = vmatprep.subr.mxu0 0.0
      %1262 = vmatpush1.msra.mxu0 %v1234
      %1263 = vmatprep.subr.mxu0 0.0
      %1264 = vmatpush1.msra.mxu0 %v1233
      %1265 = vmatprep.subr.mxu0 0.0
      %1266 = vmatpush1.msra.mxu0 %v1232
      %1267 = vmatprep.subr.mxu0 0.0
      %1268 = vmatpush1.msra.mxu0 %v1231
      %1269 = vmatprep.subr.mxu0 0.0
      %1270 = vmatpush1.msra.mxu0 %v1230
      %1271 = vmatprep.subr.mxu0 0.0
      %1272 = vmatpush1.msra.mxu0 %v1229
      %1273 = vmatprep.subr.mxu0 0.0
      %1274 = vmatpush1.msra.mxu0 %v1228
      %1275 = vmatprep.subr.mxu0 0.0
      %1276 = vmatpush1.msra.mxu0 %v1227
      %1277 = vmatprep.subr.mxu0 0.0
      %1278 = vmatpush2.msra.mxu0 0.0
      %1279 = vmatprep.subr.mxu0 0.0
      %1280 = vmatpush2.msra.mxu0 0.0
      %1281 = vmatprep.subr.mxu0 0.0
      %1282 = vmatpush2.msra.mxu0 0.0
      %1283 = vmatprep.subr.mxu0 0.0
      %1284 = vmatpush2.msra.mxu0 0.0
      %1285 = vmatprep.subr.mxu0 0.0
      %1286 = vmatpush2.msra.mxu0 0.0
      %1287 = vmatprep.subr.mxu0 0.0
      %1288 = vmatpush2.msra.mxu0 0.0
      %1289 = vmatprep.subr.mxu0 0.0
      %1290 = vmatpush2.msra.mxu0 0.0
      %1291 = vmatprep.subr.mxu0 0.0
      %1292 = vmatpush2.msra.mxu0 0.0
      %1293 = vmatprep.subr.mxu0 0.0
      %1294 = vmatpush2.msra.mxu0 0.0
      %1295 = vmatprep.subr.mxu0 0.0
      %1296 = vmatpush2.msra.mxu0 0.0
      %1297 = vmatprep.subr.mxu0 0.0
      %1298 = vmatpush2.msra.mxu0 0.0
      %1299 = vmatprep.subr.mxu0 0.0
      %1300 = vmatpush2.msra.mxu0 0.0
      %1301 = vmatprep.subr.mxu0 0.0
      %1302 = vmatpush2.msra.mxu0 0.0
      %1303 = vmatprep.subr.mxu0 0.0
      %1304 = vmatpush2.msra.mxu0 0.0
      %1305 = vmatprep.subr.mxu0 0.0
      %1306 = vmatpush2.msra.mxu0 0.0
      %1307 = vmatprep.subr.mxu0 0.0
      %1308 = vmatpush2.msra.mxu0 0.0
      %1309 = vmatprep.mubr.f32.mxu0 0.0
      %1310 = vmatmul.mubr.f32.gmra.mxu0 %v1243
      %v1311 = vpop.f32.mrf.mxu0
      %v1312 = vadd.f32 %v1241, %v1311
      %v1313 = vpop.f32.mrf.mxu0
      %1314 = vdwg.mxu0
      %v1315 = vmax.f32 %v1312, 0.0
      %v1316 = vsel %vm382, %v1315, 0.0
      %1317 = vadd.xlane.f32.xlu0 %v1316
      %v1318 = vpop.xlane.xlu0 %1317
      %v1319 = vmul.f32 %v1318, %v645
      %v1320 = vsub.f32 %v1315, %v1319
      %v1321 = vmul.f32 %v1320, %v1320
      %v1322 = vsel %vm382, %v1321, 0.0
      %1323 = vadd.xlane.f32.xlu0 %v1322
      %v1324 = vpop.xlane.xlu0 %1323
      %v1325 = vmul.f32 %v1324, %v645
      %v1326 = vadd.f32 %v1325, 1e-05
      %v1327 = vrsqrt.pop %v1326
      %v1328 = vmul.f32 %v1320, %v1327
      %v1329 = vlaneseq
      %v1330 = vshrl.u32 %v1329, 7
      %v1331 = vsub.s32 0, %v1330
      %v1332 = vrot.slane %v1236, %v1331
      %v1333 = vmul.f32 %v1328, %v1332
      %v1334 = vlaneseq
      %v1335 = vshrl.u32 %v1334, 7
      %v1336 = vsub.s32 0, %v1335
      %v1337 = vrot.slane %v1237, %v1336
      %v1338 = vadd.f32 %v1333, %v1337
      %1339 = vst.msk [vmem:[#allocation7] sm:$0xff] %vm382, %v1338
      %v1340 = vld [vmem:[%s5] sm:$0x3]
      %1341 = vxpose.xlu0.b32.start [1/16] %v907, 128
      %1342 = vxpose.xlu0.b32.cont [2/16] 0.0, 128
      %1343 = vxpose.xlu0.b32.cont [3/16] 0.0, 128
      %1344 = vxpose.xlu0.b32.cont [4/16] 0.0, 128
      %1345 = vxpose.xlu0.b32.cont [5/16] 0.0, 128
      %1346 = vxpose.xlu0.b32.cont [6/16] 0.0, 128
      %1347 = vxpose.xlu0.b32.cont [7/16] 0.0, 128
      %1348 = vxpose.xlu0.b32.cont [8/16] 0.0, 128
      %1349 = vxpose.xlu0.b32.cont [9/16] 0.0, 128
      %1350 = vxpose.xlu0.b32.cont [10/16] 0.0, 128
      %1351 = vxpose.xlu0.b32.cont [11/16] 0.0, 128
      %1352 = vxpose.xlu0.b32.cont [12/16] 0.0, 128
      %1353 = vxpose.xlu0.b32.cont [13/16] 0.0, 128
      %1354 = vxpose.xlu0.b32.cont [14/16] 0.0, 128
      %1355 = vxpose.xlu0.b32.cont [15/16] 0.0, 128
      %1356 = vxpose.xlu0.b32.end [16/16] 0.0, 128
      %v1357 = vpop.trf.xlu0
      %v1358 = vpop.trf.xlu0
      %v1359 = vpop.trf.xlu0
      %v1360 = vpop.trf.xlu0
      %v1361 = vpop.trf.xlu0
      %v1362 = vpop.trf.xlu0
      %v1363 = vpop.trf.xlu0
      %v1364 = vpop.trf.xlu0
      %v1365 = vpop.trf.xlu0
      %v1366 = vpop.trf.xlu0
      %v1367 = vpop.trf.xlu0
      %v1368 = vpop.trf.xlu0
      %v1369 = vpop.trf.xlu0
      %v1370 = vpop.trf.xlu0
      %v1371 = vpop.trf.xlu0
      %v1372 = vpop.trf.xlu0
      %v1374 = vsel %vm382, %v1357, 0
      %1376 = vmatprep.subr.mxu0 0.0
      %1377 = vmatpush1.msra.mxu0 0.0
      %1378 = vmatprep.subr.mxu0 0.0
      %1379 = vmatpush1.msra.mxu0 0.0
      %1380 = vmatprep.subr.mxu0 0.0
      %1381 = vmatpush1.msra.mxu0 0.0
      %1382 = vmatprep.subr.mxu0 0.0
      %1383 = vmatpush1.msra.mxu0 0.0
      %1384 = vmatprep.subr.mxu0 0.0
      %1385 = vmatpush1.msra.mxu0 0.0
      %1386 = vmatprep.subr.mxu0 0.0
      %1387 = vmatpush1.msra.mxu0 0.0
      %1388 = vmatprep.subr.mxu0 0.0
      %1389 = vmatpush1.msra.mxu0 0.0
      %1390 = vmatprep.subr.mxu0 0.0
      %1391 = vmatpush1.msra.mxu0 0.0
      %1392 = vmatprep.subr.mxu0 0.0
      %1393 = vmatpush1.msra.mxu0 0.0
      %1394 = vmatprep.subr.mxu0 0.0
      %1395 = vmatpush1.msra.mxu0 0.0
      %1396 = vmatprep.subr.mxu0 0.0
      %1397 = vmatpush1.msra.mxu0 0.0
      %1398 = vmatprep.subr.mxu0 0.0
      %1399 = vmatpush1.msra.mxu0 0.0
      %1400 = vmatprep.subr.mxu0 0.0
      %1401 = vmatpush1.msra.mxu0 0.0
      %1402 = vmatprep.subr.mxu0 0.0
      %1403 = vmatpush1.msra.mxu0 0.0
      %1404 = vmatprep.subr.mxu0 0.0
      %1405 = vmatpush1.msra.mxu0 0.0
      %1406 = vmatprep.subr.mxu0 0.0
      %1407 = vmatpush1.msra.mxu0 %v1338
      %1408 = vmatprep.subr.mxu0 0.0
      %1409 = vmatpush2.msra.mxu0 0.0
      %1410 = vmatprep.subr.mxu0 0.0
      %1411 = vmatpush2.msra.mxu0 0.0
      %1412 = vmatprep.subr.mxu0 0.0
      %1413 = vmatpush2.msra.mxu0 0.0
      %1414 = vmatprep.subr.mxu0 0.0
      %1415 = vmatpush2.msra.mxu0 0.0
      %1416 = vmatprep.subr.mxu0 0.0
      %1417 = vmatpush2.msra.mxu0 0.0
      %1418 = vmatprep.subr.mxu0 0.0
      %1419 = vmatpush2.msra.mxu0 0.0
      %1420 = vmatprep.subr.mxu0 0.0
      %1421 = vmatpush2.msra.mxu0 0.0
      %1422 = vmatprep.subr.mxu0 0.0
      %1423 = vmatpush2.msra.mxu0 0.0
      %1424 = vmatprep.subr.mxu0 0.0
      %1425 = vmatpush2.msra.mxu0 0.0
      %1426 = vmatprep.subr.mxu0 0.0
      %1427 = vmatpush2.msra.mxu0 0.0
      %1428 = vmatprep.subr.mxu0 0.0
      %1429 = vmatpush2.msra.mxu0 0.0
      %1430 = vmatprep.subr.mxu0 0.0
      %1431 = vmatpush2.msra.mxu0 0.0
      %1432 = vmatprep.subr.mxu0 0.0
      %1433 = vmatpush2.msra.mxu0 0.0
      %1434 = vmatprep.subr.mxu0 0.0
      %1435 = vmatpush2.msra.mxu0 0.0
      %1436 = vmatprep.subr.mxu0 0.0
      %1437 = vmatpush2.msra.mxu0 0.0
      %1438 = vmatprep.subr.mxu0 0.0
      %1439 = vmatpush2.msra.mxu0 0.0
      %1440 = vmatprep.mubr.f32.mxu0 0.0
      %1441 = vmatmul.mubr.f32.gmra.mxu0 %v1374
      %v1442 = vpop.f32.mrf.mxu0
      %v1443 = vadd.f32 0.0, %v1442
      %v1444 = vpop.f32.mrf.mxu0
      %1445 = vdwg.mxu0
      %v1446 = vmax.f32 %v1340, 1.0
      %1448 = vset.pattern.permute.xlu0 1
      %1449 = vperm.xlu0 %1448, %v1446
      %v1450 = vpop.permute.xlu0 %1449
      %v1452 = vrcp.pop %v1450
      %v1453 = vmul.f32 %v1443, %v1452
      %v1454 = vld [vmem:[#allocation6] sm:$0x3]
      %1455 = vset.pattern.permute.xlu0 0
      %1456 = vperm.xlu0 %1455, %v1446
      %v1457 = vpop.permute.xlu0 %1456
      %v1459 = vrcp.pop %v1457
      %v1460 = vmul.f32 %v1454, %v1459
      %v1461 = vld [vmem:[%s10] sm:$0x7]
      %v1462 = vld [vmem:[%s10 + $0x3] sm:$0xff]
      %v1463 = vld [vmem:[%s10 + $0xb] sm:$0xff]
      %v1464 = vld [vmem:[%s10 + $0x13] sm:$0x1]
      %v1465 = vld [vmem:[%s3] sm:$0x3]
      %v1467 = vsel %vm382, %v1453, 0
      %1469 = vmatprep.subr.mxu0 0.0
      %1470 = vmatpush1.msra.mxu0 0.0
      %1471 = vmatprep.subr.mxu0 0.0
      %1472 = vmatpush1.msra.mxu0 0.0
      %1473 = vmatprep.subr.mxu0 0.0
      %1474 = vmatpush1.msra.mxu0 0.0
      %1475 = vmatprep.subr.mxu0 0.0
      %1476 = vmatpush1.msra.mxu0 0.0
      %1477 = vmatprep.subr.mxu0 0.0
      %1478 = vmatpush1.msra.mxu0 0.0
      %1479 = vmatprep.subr.mxu0 0.0
      %1480 = vmatpush1.msra.mxu0 0.0
      %1481 = vmatprep.subr.mxu0 0.0
      %1482 = vmatpush1.msra.mxu0 0.0
      %1483 = vmatprep.subr.mxu0 0.0
      %1484 = vmatpush1.msra.mxu0 0.0
      %1485 = vmatprep.subr.mxu0 0.0
      %1486 = vmatpush1.msra.mxu0 0.0
      %1487 = vmatprep.subr.mxu0 0.0
      %1488 = vmatpush1.msra.mxu0 0.0
      %1489 = vmatprep.subr.mxu0 0.0
      %1490 = vmatpush1.msra.mxu0 0.0
      %1491 = vmatprep.subr.mxu0 0.0
      %1492 = vmatpush1.msra.mxu0 0.0
      %1493 = vmatprep.subr.mxu0 0.0
      %1494 = vmatpush1.msra.mxu0 0.0
      %1495 = vmatprep.subr.mxu0 0.0
      %1496 = vmatpush1.msra.mxu0 0.0
      %1497 = vmatprep.subr.mxu0 0.0
      %1498 = vmatpush1.msra.mxu0 0.0
      %1499 = vmatprep.subr.mxu0 0.0
      %1500 = vmatpush1.msra.mxu0 %v1462
      %1501 = vmatprep.subr.mxu0 0.0
      %1502 = vmatpush2.msra.mxu0 0.0
      %1503 = vmatprep.subr.mxu0 0.0
      %1504 = vmatpush2.msra.mxu0 0.0
      %1505 = vmatprep.subr.mxu0 0.0
      %1506 = vmatpush2.msra.mxu0 0.0
      %1507 = vmatprep.subr.mxu0 0.0
      %1508 = vmatpush2.msra.mxu0 0.0
      %1509 = vmatprep.subr.mxu0 0.0
      %1510 = vmatpush2.msra.mxu0 0.0
      %1511 = vmatprep.subr.mxu0 0.0
      %1512 = vmatpush2.msra.mxu0 0.0
      %1513 = vmatprep.subr.mxu0 0.0
      %1514 = vmatpush2.msra.mxu0 0.0
      %1515 = vmatprep.subr.mxu0 0.0
      %1516 = vmatpush2.msra.mxu0 0.0
      %1517 = vmatprep.subr.mxu0 0.0
      %1518 = vmatpush2.msra.mxu0 0.0
      %1519 = vmatprep.subr.mxu0 0.0
      %1520 = vmatpush2.msra.mxu0 0.0
      %1521 = vmatprep.subr.mxu0 0.0
      %1522 = vmatpush2.msra.mxu0 0.0
      %1523 = vmatprep.subr.mxu0 0.0
      %1524 = vmatpush2.msra.mxu0 0.0
      %1525 = vmatprep.subr.mxu0 0.0
      %1526 = vmatpush2.msra.mxu0 0.0
      %1527 = vmatprep.subr.mxu0 0.0
      %1528 = vmatpush2.msra.mxu0 0.0
      %1529 = vmatprep.subr.mxu0 0.0
      %1530 = vmatpush2.msra.mxu0 0.0
      %1531 = vmatprep.subr.mxu0 0.0
      %1532 = vmatpush2.msra.mxu0 0.0
      %1533 = vmatprep.mubr.f32.mxu0 0.0
      %1534 = vmatmul.mubr.f32.gmra.mxu0 %v1467
      %v1535 = vpop.f32.mrf.mxu0
      %v1536 = vadd.f32 0.0, %v1535
      %v1537 = vpop.f32.mrf.mxu0
      %1538 = vdwg.mxu0
      %v1540 = vsel %vm1142, %v1465, 0
      %v1543 = vsel %vm1146, %v1461, 0
      %1545 = vmatprep.subr.mxu0 0.0
      %1546 = vmatpush1.msra.mxu0 0.0
      %1547 = vmatprep.subr.mxu0 0.0
      %1548 = vmatpush1.msra.mxu0 0.0
      %1549 = vmatprep.subr.mxu0 0.0
      %1550 = vmatpush1.msra.mxu0 0.0
      %1551 = vmatprep.subr.mxu0 0.0
      %1552 = vmatpush1.msra.mxu0 0.0
      %1553 = vmatprep.subr.mxu0 0.0
      %1554 = vmatpush1.msra.mxu0 0.0
      %1555 = vmatprep.subr.mxu0 0.0
      %1556 = vmatpush1.msra.mxu0 0.0
      %1557 = vmatprep.subr.mxu0 0.0
      %1558 = vmatpush1.msra.mxu0 0.0
      %1559 = vmatprep.subr.mxu0 0.0
      %1560 = vmatpush1.msra.mxu0 0.0
      %1561 = vmatprep.subr.mxu0 0.0
      %1562 = vmatpush1.msra.mxu0 0.0
      %1563 = vmatprep.subr.mxu0 0.0
      %1564 = vmatpush1.msra.mxu0 0.0
      %1565 = vmatprep.subr.mxu0 0.0
      %1566 = vmatpush1.msra.mxu0 0.0
      %1567 = vmatprep.subr.mxu0 0.0
      %1568 = vmatpush1.msra.mxu0 0.0
      %1569 = vmatprep.subr.mxu0 0.0
      %1570 = vmatpush1.msra.mxu0 0.0
      %1571 = vmatprep.subr.mxu0 0.0
      %1572 = vmatpush1.msra.mxu0 0.0
      %1573 = vmatprep.subr.mxu0 0.0
      %1574 = vmatpush1.msra.mxu0 0.0
      %1575 = vmatprep.subr.mxu0 0.0
      %1576 = vmatpush1.msra.mxu0 %v1543
      %1577 = vmatprep.subr.mxu0 0.0
      %1578 = vmatpush2.msra.mxu0 0.0
      %1579 = vmatprep.subr.mxu0 0.0
      %1580 = vmatpush2.msra.mxu0 0.0
      %1581 = vmatprep.subr.mxu0 0.0
      %1582 = vmatpush2.msra.mxu0 0.0
      %1583 = vmatprep.subr.mxu0 0.0
      %1584 = vmatpush2.msra.mxu0 0.0
      %1585 = vmatprep.subr.mxu0 0.0
      %1586 = vmatpush2.msra.mxu0 0.0
      %1587 = vmatprep.subr.mxu0 0.0
      %1588 = vmatpush2.msra.mxu0 0.0
      %1589 = vmatprep.subr.mxu0 0.0
      %1590 = vmatpush2.msra.mxu0 0.0
      %1591 = vmatprep.subr.mxu0 0.0
      %1592 = vmatpush2.msra.mxu0 0.0
      %1593 = vmatprep.subr.mxu0 0.0
      %1594 = vmatpush2.msra.mxu0 0.0
      %1595 = vmatprep.subr.mxu0 0.0
      %1596 = vmatpush2.msra.mxu0 0.0
      %1597 = vmatprep.subr.mxu0 0.0
      %1598 = vmatpush2.msra.mxu0 0.0
      %1599 = vmatprep.subr.mxu0 0.0
      %1600 = vmatpush2.msra.mxu0 0.0
      %1601 = vmatprep.subr.mxu0 0.0
      %1602 = vmatpush2.msra.mxu0 0.0
      %1603 = vmatprep.subr.mxu0 0.0
      %1604 = vmatpush2.msra.mxu0 0.0
      %1605 = vmatprep.subr.mxu0 0.0
      %1606 = vmatpush2.msra.mxu0 0.0
      %1607 = vmatprep.subr.mxu0 0.0
      %1608 = vmatpush2.msra.mxu0 0.0
      %1609 = vmatprep.mubr.f32.mxu0 0.0
      %1610 = vmatmul.mubr.f32.gmra.mxu0 %v1540
      %v1611 = vpop.f32.mrf.mxu0
      %v1612 = vadd.f32 %v1536, %v1611
      %v1613 = vpop.f32.mrf.mxu0
      %1614 = vdwg.mxu0
      %v1616 = vsel %vm382, %v1460, 0
      %1618 = vmatprep.subr.mxu0 0.0
      %1619 = vmatpush1.msra.mxu0 0.0
      %1620 = vmatprep.subr.mxu0 0.0
      %1621 = vmatpush1.msra.mxu0 0.0
      %1622 = vmatprep.subr.mxu0 0.0
      %1623 = vmatpush1.msra.mxu0 0.0
      %1624 = vmatprep.subr.mxu0 0.0
      %1625 = vmatpush1.msra.mxu0 0.0
      %1626 = vmatprep.subr.mxu0 0.0
      %1627 = vmatpush1.msra.mxu0 0.0
      %1628 = vmatprep.subr.mxu0 0.0
      %1629 = vmatpush1.msra.mxu0 0.0
      %1630 = vmatprep.subr.mxu0 0.0
      %1631 = vmatpush1.msra.mxu0 0.0
      %1632 = vmatprep.subr.mxu0 0.0
      %1633 = vmatpush1.msra.mxu0 0.0
      %1634 = vmatprep.subr.mxu0 0.0
      %1635 = vmatpush1.msra.mxu0 0.0
      %1636 = vmatprep.subr.mxu0 0.0
      %1637 = vmatpush1.msra.mxu0 0.0
      %1638 = vmatprep.subr.mxu0 0.0
      %1639 = vmatpush1.msra.mxu0 0.0
      %1640 = vmatprep.subr.mxu0 0.0
      %1641 = vmatpush1.msra.mxu0 0.0
      %1642 = vmatprep.subr.mxu0 0.0
      %1643 = vmatpush1.msra.mxu0 0.0
      %1644 = vmatprep.subr.mxu0 0.0
      %1645 = vmatpush1.msra.mxu0 0.0
      %1646 = vmatprep.subr.mxu0 0.0
      %1647 = vmatpush1.msra.mxu0 0.0
      %1648 = vmatprep.subr.mxu0 0.0
      %1649 = vmatpush1.msra.mxu0 %v1463
      %1650 = vmatprep.subr.mxu0 0.0
      %1651 = vmatpush2.msra.mxu0 0.0
      %1652 = vmatprep.subr.mxu0 0.0
      %1653 = vmatpush2.msra.mxu0 0.0
      %1654 = vmatprep.subr.mxu0 0.0
      %1655 = vmatpush2.msra.mxu0 0.0
      %1656 = vmatprep.subr.mxu0 0.0
      %1657 = vmatpush2.msra.mxu0 0.0
      %1658 = vmatprep.subr.mxu0 0.0
      %1659 = vmatpush2.msra.mxu0 0.0
      %1660 = vmatprep.subr.mxu0 0.0
      %1661 = vmatpush2.msra.mxu0 0.0
      %1662 = vmatprep.subr.mxu0 0.0
      %1663 = vmatpush2.msra.mxu0 0.0
      %1664 = vmatprep.subr.mxu0 0.0
      %1665 = vmatpush2.msra.mxu0 0.0
      %1666 = vmatprep.subr.mxu0 0.0
      %1667 = vmatpush2.msra.mxu0 0.0
      %1668 = vmatprep.subr.mxu0 0.0
      %1669 = vmatpush2.msra.mxu0 0.0
      %1670 = vmatprep.subr.mxu0 0.0
      %1671 = vmatpush2.msra.mxu0 0.0
      %1672 = vmatprep.subr.mxu0 0.0
      %1673 = vmatpush2.msra.mxu0 0.0
      %1674 = vmatprep.subr.mxu0 0.0
      %1675 = vmatpush2.msra.mxu0 0.0
      %1676 = vmatprep.subr.mxu0 0.0
      %1677 = vmatpush2.msra.mxu0 0.0
      %1678 = vmatprep.subr.mxu0 0.0
      %1679 = vmatpush2.msra.mxu0 0.0
      %1680 = vmatprep.subr.mxu0 0.0
      %1681 = vmatpush2.msra.mxu0 0.0
      %1682 = vmatprep.mubr.f32.mxu0 0.0
      %1683 = vmatmul.mubr.f32.gmra.mxu0 %v1616
      %v1684 = vpop.f32.mrf.mxu0
      %v1685 = vadd.f32 0.0, %v1684
      %v1686 = vpop.f32.mrf.mxu0
      %1687 = vdwg.mxu0
      %v1688 = vadd.f32 %v1612, %v1685
      %v1689 = vlaneseq
      %v1690 = vshrl.u32 %v1689, 7
      %v1691 = vsub.s32 0, %v1690
      %v1692 = vrot.slane %v1464, %v1691
      %v1693 = vadd.f32 %v1688, %v1692
      %v1694 = vmax.f32 %v1693, 0.0
      %v1695 = vld [vmem:[%s11] sm:$0xff]
      %v1696 = vld [vmem:[%s11 + $0x8] sm:$0xff]
      %v1697 = vld [vmem:[%s11 + $0x10] sm:$0xff]
      %v1698 = vld [vmem:[%s11 + $0x18] sm:$0xff]
      %v1699 = vld [vmem:[%s11 + $0x20] sm:$0xff]
      %v1700 = vld [vmem:[%s11 + $0x28] sm:$0xff]
      %v1701 = vld [vmem:[%s11 + $0x30] sm:$0xff]
      %v1702 = vld [vmem:[%s11 + $0x38] sm:$0xff]
      %v1703 = vld [vmem:[%s11 + $0x40] sm:$0x1]
      %v1704 = vld [vmem:[%s11 + $0x41] sm:$0x1]
      %v1705 = vld [vmem:[%s11 + $0x42] sm:$0x1]
      %v1706 = vlaneseq
      %v1707 = vshrl.u32 %v1706, 7
      %v1708 = vsub.s32 0, %v1707
      %v1709 = vrot.slane %v1703, %v1708
      %v1711 = vsel %vm555, %v1694, 0
      %1713 = vmatprep.subr.mxu0 0.0
      %1714 = vmatpush1.msra.mxu0 0.0
      %1715 = vmatprep.subr.mxu0 0.0
      %1716 = vmatpush1.msra.mxu0 0.0
      %1717 = vmatprep.subr.mxu0 0.0
      %1718 = vmatpush1.msra.mxu0 0.0
      %1719 = vmatprep.subr.mxu0 0.0
      %1720 = vmatpush1.msra.mxu0 0.0
      %1721 = vmatprep.subr.mxu0 0.0
      %1722 = vmatpush1.msra.mxu0 0.0
      %1723 = vmatprep.subr.mxu0 0.0
      %1724 = vmatpush1.msra.mxu0 0.0
      %1725 = vmatprep.subr.mxu0 0.0
      %1726 = vmatpush1.msra.mxu0 0.0
      %1727 = vmatprep.subr.mxu0 0.0
      %1728 = vmatpush1.msra.mxu0 0.0
      %1729 = vmatprep.subr.mxu0 0.0
      %1730 = vmatpush1.msra.mxu0 %v1702
      %1731 = vmatprep.subr.mxu0 0.0
      %1732 = vmatpush1.msra.mxu0 %v1701
      %1733 = vmatprep.subr.mxu0 0.0
      %1734 = vmatpush1.msra.mxu0 %v1700
      %1735 = vmatprep.subr.mxu0 0.0
      %1736 = vmatpush1.msra.mxu0 %v1699
      %1737 = vmatprep.subr.mxu0 0.0
      %1738 = vmatpush1.msra.mxu0 %v1698
      %1739 = vmatprep.subr.mxu0 0.0
      %1740 = vmatpush1.msra.mxu0 %v1697
      %1741 = vmatprep.subr.mxu0 0.0
      %1742 = vmatpush1.msra.mxu0 %v1696
      %1743 = vmatprep.subr.mxu0 0.0
      %1744 = vmatpush1.msra.mxu0 %v1695
      %1745 = vmatprep.subr.mxu0 0.0
      %1746 = vmatpush2.msra.mxu0 0.0
      %1747 = vmatprep.subr.mxu0 0.0
      %1748 = vmatpush2.msra.mxu0 0.0
      %1749 = vmatprep.subr.mxu0 0.0
      %1750 = vmatpush2.msra.mxu0 0.0
      %1751 = vmatprep.subr.mxu0 0.0
      %1752 = vmatpush2.msra.mxu0 0.0
      %1753 = vmatprep.subr.mxu0 0.0
      %1754 = vmatpush2.msra.mxu0 0.0
      %1755 = vmatprep.subr.mxu0 0.0
      %1756 = vmatpush2.msra.mxu0 0.0
      %1757 = vmatprep.subr.mxu0 0.0
      %1758 = vmatpush2.msra.mxu0 0.0
      %1759 = vmatprep.subr.mxu0 0.0
      %1760 = vmatpush2.msra.mxu0 0.0
      %1761 = vmatprep.subr.mxu0 0.0
      %1762 = vmatpush2.msra.mxu0 0.0
      %1763 = vmatprep.subr.mxu0 0.0
      %1764 = vmatpush2.msra.mxu0 0.0
      %1765 = vmatprep.subr.mxu0 0.0
      %1766 = vmatpush2.msra.mxu0 0.0
      %1767 = vmatprep.subr.mxu0 0.0
      %1768 = vmatpush2.msra.mxu0 0.0
      %1769 = vmatprep.subr.mxu0 0.0
      %1770 = vmatpush2.msra.mxu0 0.0
      %1771 = vmatprep.subr.mxu0 0.0
      %1772 = vmatpush2.msra.mxu0 0.0
      %1773 = vmatprep.subr.mxu0 0.0
      %1774 = vmatpush2.msra.mxu0 0.0
      %1775 = vmatprep.subr.mxu0 0.0
      %1776 = vmatpush2.msra.mxu0 0.0
      %1777 = vmatprep.mubr.f32.mxu0 0.0
      %1778 = vmatmul.mubr.f32.gmra.mxu0 %v1711
      %v1779 = vpop.f32.mrf.mxu0
      %v1780 = vadd.f32 %v1709, %v1779
      %v1781 = vpop.f32.mrf.mxu0
      %1782 = vdwg.mxu0
      %v1783 = vmax.f32 %v1780, 0.0
      %v1784 = vsel %vm896, %v1783, 0.0
      %1785 = vadd.xlane.f32.xlu0 %v1784
      %v1786 = vpop.xlane.xlu0 %1785
      %v1787 = vmul.f32 %v1786, %v645
      %v1788 = vsub.f32 %v1783, %v1787
      %v1789 = vmul.f32 %v1788, %v1788
      %v1790 = vsel %vm896, %v1789, 0.0
      %1791 = vadd.xlane.f32.xlu0 %v1790
      %v1792 = vpop.xlane.xlu0 %1791
      %v1793 = vmul.f32 %v1792, %v645
      %v1794 = vadd.f32 %v1793, 1e-05
      %v1795 = vrsqrt.pop %v1794
      %v1796 = vmul.f32 %v1788, %v1795
      %v1797 = vlaneseq
      %v1798 = vshrl.u32 %v1797, 7
      %v1799 = vsub.s32 0, %v1798
      %v1800 = vrot.slane %v1704, %v1799
      %v1801 = vmul.f32 %v1796, %v1800
      %v1802 = vlaneseq
      %v1803 = vshrl.u32 %v1802, 7
      %v1804 = vsub.s32 0, %v1803
      %v1805 = vrot.slane %v1705, %v1804
      %v1806 = vadd.f32 %v1801, %v1805
      %1807 = vst.msk [vmem:[#allocation9] sm:$0x3] %vm896, %v1806
    $region57: #{graphnet_forward.1} parent=1 // pred_fallthru
      _
    // Predicated region
    $region58: #{graphnet_forward.1} parent=1 // pred_check
      _
    $region59: #{graphnet_forward.1} parent=1 // pred_check_branch
      %1809 = sbr.rel (0) target = $region61
    $region60: #{graphnet_forward.1} parent=1 // pred_region
      _
    $region61: #{graphnet_forward.1} parent=1 // pred_fallthru
      _
    // Predicated region
    $region62: #{graphnet_forward.1} parent=1 // pred_check
      _
    $region63: #{graphnet_forward.1} parent=1 // pred_check_branch
      %1811 = sbr.rel (0) target = $region65
    $region64: #{graphnet_forward.1} parent=1 // pred_region
      %s1813 = ssub.s32 128, 128
      %1814 = vsyncadd [#allocation8], %s1813
      %s1816 = sshll.u32 [#allocation7], 4
      %s1817 = int_to_ptr.vmem [resolvable:$true] %s1816
      %1819 = dma.vmem_to_hbm [thread:$0]  %s1817, 128, %s13, [#allocation8]
    $region65: #{graphnet_forward.1} parent=1 // pred_fallthru
      _
    // Predicated region
    $region66: #{graphnet_forward.1} parent=1 // pred_check
      _
    $region67: #{graphnet_forward.1} parent=1 // pred_check_branch
      %1821 = sbr.rel (0) target = $region69
    $region68: #{graphnet_forward.1} parent=1 // pred_region
      %s1823 = ssub.s32 32, 32
      %1824 = vsyncadd [#allocation10], %s1823
      %s1826 = sshll.u32 [#allocation9], 4
      %s1827 = int_to_ptr.vmem [resolvable:$true] %s1826
      %1829 = dma.vmem_to_hbm [thread:$0]  %s1827, 32, %s14, [#allocation10]
    $region69: #{graphnet_forward.1} parent=1 // pred_fallthru
      _
    // Predicated region
    $region70: #{graphnet_forward.1} parent=1 // pred_check
      _
    $region71: #{graphnet_forward.1} parent=1 // pred_check_branch
      %1831 = sbr.rel (0) target = $region73
    $region72: #{graphnet_forward.1} parent=1 // pred_region
      _
    $region73: #{graphnet_forward.1} parent=1 // pred_fallthru
      _
    // Predicated region
    $region74: #{graphnet_forward.1} parent=1 // pred_check
      _
    $region75: #{graphnet_forward.1} parent=1 // pred_check_branch
      %1833 = sbr.rel (0) target = $region77
    $region76: #{graphnet_forward.1} parent=1 // pred_region
      %1834 = dma.done [#allocation8], 128
    $region77: #{graphnet_forward.1} parent=1 // pred_fallthru
      _
    // Predicated region
    $region78: #{graphnet_forward.1} parent=1 // pred_check
      _
    $region79: #{graphnet_forward.1} parent=1 // pred_check_branch
      %1836 = sbr.rel (0) target = $region81
    $region80: #{graphnet_forward.1} parent=1 // pred_region
      %1837 = dma.done [#allocation10], 32
    $region81: #{graphnet_forward.1} parent=1 // pred_fallthru
      _
    %1838 = vsyncpa [#allocation8], 1
    %1839 = vsyncpa [#allocation10], 1

</llo_original>
